<compile_context>
chip_gen: v7x
topology: tpu7x:2x2x1
jax: 0.10.0
libtpu: 0.0.40
codegen_flags: <defaults>
</compile_context>

<pallas_src>
import jax
import jax.numpy as jnp
import numpy as np
from jax.experimental import pallas as pl
from jax.experimental.pallas import tpu as pltpu


# ----------------------------- Pallas kernel ---------------------------------

def _ffn_kernel(x_ref, w1_ref, b1_ref, w2_ref, b2_ref, o_ref):
    # stage 1: Linear(d_model -> d_ff) + ReLU
    h = jnp.dot(x_ref[...], w1_ref[...], preferred_element_type=jnp.float32)
    h = jnp.maximum(h + b1_ref[...], 0.0)
    # dropout: identity (inference mode)
    # stage 2: Linear(d_ff -> d_model)
    o = jnp.dot(h, w2_ref[...], preferred_element_type=jnp.float32) + b2_ref[...]
    o_ref[...] = o.astype(o_ref.dtype)


# ------------------------------ wrapper ---------------------------------------

def ffn_pallas(x, w1, b1, w2, b2, *, block_rows=256):
    """x: (..., d_model); w1: (d_ff, d_model); w2: (d_model, d_ff) (torch layouts)."""
    d_model = x.shape[-1]
    d_ff = w1.shape[0]

    x2d = x.reshape(-1, d_model).astype(jnp.float32)
    M = x2d.shape[0]

    # Row-tile: multiple of 8, capped by the row count and the VMEM-friendly default.
    tm = min(block_rows, M)
    tm = max(8, (tm // 8) * 8)
    Mp = pl.cdiv(M, tm) * tm
    if Mp != M:
        x2d = jnp.pad(x2d, ((0, Mp - M), (0, 0)))

    # Torch stores Linear weight as (out, in); transpose once so the kernel does x @ W.
    w1m = jnp.transpose(w1).astype(jnp.float32)          # (d_model, d_ff)
    w2m = jnp.transpose(w2).astype(jnp.float32)          # (d_ff, d_model)
    b1r = b1.reshape(1, d_ff).astype(jnp.float32)
    b2r = b2.reshape(1, d_model).astype(jnp.float32)

    grid = (Mp // tm,)
    out2d = pl.pallas_call(
        _ffn_kernel,
        out_shape=jax.ShapeDtypeStruct((Mp, d_model), jnp.float32),
        grid_spec=pltpu.PrefetchScalarGridSpec(
            num_scalar_prefetch=0,
            grid=grid,
            in_specs=[
                # row tile streams with the grid
                pl.BlockSpec((tm, d_model), lambda i: (i, 0)),
                # weights / biases: constant index_map -> DMA'd once, VMEM-resident
                pl.BlockSpec((d_model, d_ff), lambda i: (0, 0)),
                pl.BlockSpec((1, d_ff), lambda i: (0, 0)),
                pl.BlockSpec((d_ff, d_model), lambda i: (0, 0)),
                pl.BlockSpec((1, d_model), lambda i: (0, 0)),
            ],
            out_specs=pl.BlockSpec((tm, d_model), lambda i: (i, 0)),
        ),
        compiler_params=pltpu.CompilerParams(
            dimension_semantics=("parallel",),      # shard row tiles across TCs (v7x)
            vmem_limit_bytes=64 << 20,
        ),
    )(x2d, w1m, b1r, w2m, b2r)

    out2d = out2d[:M]
    return out2d.reshape(x.shape[:-1] + (d_model,)).astype(x.dtype)


# ------------------------------ pure-JAX reference ----------------------------

def _reference(x, w1, b1, w2, b2):
    h = jnp.maximum(jnp.dot(x, w1.T) + b1, 0.0)
    # dropout: identity (inference mode)
    return jnp.dot(h, w2.T) + b2


# ----------------------------------- main -------------------------------------

def _init_params(key, d_model, d_ff):
    k1, k2, k3, k4 = jax.random.split(key, 4)
    s1 = 1.0 / np.sqrt(d_model)
    s2 = 1.0 / np.sqrt(d_ff)
    return {
        "w1": s1 * jax.random.normal(k1, (d_ff, d_model), dtype=jnp.float32),
        "b1": s1 * jax.random.normal(k2, (d_ff,), dtype=jnp.float32),
        "w2": s2 * jax.random.normal(k3, (d_model, d_ff), dtype=jnp.float32),
        "b2": s2 * jax.random.normal(k4, (d_model,), dtype=jnp.float32),
    }


if __name__ == "__main__":
    B, S, d_model, d_ff = 2, 512, 128, 512    # 1024 rows -> 4 grid steps at tm=256

    key = jax.random.PRNGKey(0)
    k_x, k_p = jax.random.split(key)
    x = jax.random.normal(k_x, (B, S, d_model), dtype=jnp.float32)
    p = _init_params(k_p, d_model, d_ff)

    out = ffn_pallas(x, p["w1"], p["b1"], p["w2"], p["b2"])
    out = jax.block_until_ready(out)

    ref = jax.block_until_ready(_reference(x, p["w1"], p["b1"], p["w2"], p["b2"]))
    # loose tolerance: both paths use TPU default (bf16-pass) matmul precision with
    # different blocking; a real layout/semantics bug would be O(1) off.
    np.testing.assert_allclose(np.asarray(out), np.asarray(ref), rtol=5e-2, atol=5e-2)

    print("KERNEL_OK")
</pallas_src>

<mosaic_0001>
module attributes {stable_mosaic.version = 11 : i64} {
  func.func @_ffn_kernel(%arg0: i32, %arg1: memref<256x128xf32, #tpu.memory_space<vmem>>, %arg2: memref<128x512xf32, #tpu.memory_space<vmem>>, %arg3: memref<1x512xf32, #tpu.memory_space<vmem>>, %arg4: memref<512x128xf32, #tpu.memory_space<vmem>>, %arg5: memref<1x128xf32, #tpu.memory_space<vmem>>, %arg6: memref<256x128xf32, #tpu.memory_space<vmem>>) attributes {dimension_semantics = [#tpu.dimension_semantics<parallel>], iteration_bounds = array<i64: 4>, scalar_prefetch = 0 : i64, scratch_operands = 0 : i64, tpu.core_type = #tpu.core_type<tc>, window_params = [{transform_indices = @transform_0, window_bounds = array<i64: 256, 128>}, {pipeline_mode = #tpu.pipeline_mode<synchronous>, transform_indices = @transform_1, window_bounds = array<i64: 128, 512>}, {pipeline_mode = #tpu.pipeline_mode<synchronous>, transform_indices = @transform_2, window_bounds = array<i64: 1, 512>}, {pipeline_mode = #tpu.pipeline_mode<synchronous>, transform_indices = @transform_3, window_bounds = array<i64: 512, 128>}, {pipeline_mode = #tpu.pipeline_mode<synchronous>, transform_indices = @transform_4, window_bounds = array<i64: 1, 128>}, {transform_indices = @transform_5, window_bounds = array<i64: 256, 128>}]} {
    %c0 = arith.constant 0 : index
    %c0_0 = arith.constant 0 : index
    %0 = vector.load %arg1[%c0, %c0_0] : memref<256x128xf32, #tpu.memory_space<vmem>>, vector<256x128xf32>
    %c0_1 = arith.constant 0 : index
    %c0_2 = arith.constant 0 : index
    %1 = vector.load %arg2[%c0_1, %c0_2] : memref<128x512xf32, #tpu.memory_space<vmem>>, vector<128x512xf32>
    %cst = arith.constant dense<0.000000e+00> : vector<256x512xf32>
    %2 = tpu.matmul %0, %1, %cst {dimension_numbers = #tpu.dot_dimension_numbers<[1], [0], [0], [1], [0, 0, 1, 1], [], []>} : vector<256x128xf32>, vector<128x512xf32>, vector<256x512xf32> -> vector<256x512xf32>
    %c0_3 = arith.constant 0 : index
    %c0_4 = arith.constant 0 : index
    %3 = vector.load %arg3[%c0_3, %c0_4] : memref<1x512xf32, #tpu.memory_space<vmem>>, vector<1x512xf32>
    %4 = vector.broadcast %3 : vector<1x512xf32> to vector<256x512xf32>
    %5 = arith.addf %2, %4 : vector<256x512xf32>
    %cst_5 = arith.constant 0.000000e+00 : f32
    %6 = vector.broadcast %cst_5 : f32 to vector<256x512xf32>
    %7 = arith.maximumf %5, %6 : vector<256x512xf32>
    %c0_6 = arith.constant 0 : index
    %c0_7 = arith.constant 0 : index
    %8 = vector.load %arg4[%c0_6, %c0_7] : memref<512x128xf32, #tpu.memory_space<vmem>>, vector<512x128xf32>
    %cst_8 = arith.constant dense<0.000000e+00> : vector<256x128xf32>
    %9 = tpu.matmul %7, %8, %cst_8 {dimension_numbers = #tpu.dot_dimension_numbers<[1], [0], [0], [1], [0, 0, 1, 1], [], []>} : vector<256x512xf32>, vector<512x128xf32>, vector<256x128xf32> -> vector<256x128xf32>
    %c0_9 = arith.constant 0 : index
    %c0_10 = arith.constant 0 : index
    %10 = vector.load %arg5[%c0_9, %c0_10] : memref<1x128xf32, #tpu.memory_space<vmem>>, vector<1x128xf32>
    %11 = vector.broadcast %10 : vector<1x128xf32> to vector<256x128xf32>
    %12 = arith.addf %9, %11 : vector<256x128xf32>
    %c0_11 = arith.constant 0 : index
    %c0_12 = arith.constant 0 : index
    %13 = vector.load %arg6[%c0_11, %c0_12] : memref<256x128xf32, #tpu.memory_space<vmem>>, vector<256x128xf32>
    tpu.vector_store %arg6[%c0_11, %c0_12], %12 {strides = array<i32>} : memref<256x128xf32, #tpu.memory_space<vmem>>, vector<256x128xf32>,
    return
  }
  func.func @transform_0(%arg0: i32) -> (i32, i32) {
    %c0_i32 = arith.constant 0 : i32
    %c0_i32_0 = arith.constant 0 : i32
    return %arg0, %c0_i32 : i32, i32
  }
  func.func @transform_1(%arg0: i32) -> (i32, i32) {
    %c0_i32 = arith.constant 0 : i32
    %c0_i32_0 = arith.constant 0 : i32
    %c0_i32_1 = arith.constant 0 : i32
    return %c0_i32, %c0_i32_0 : i32, i32
  }
  func.func @transform_2(%arg0: i32) -> (i32, i32) {
    %c0_i32 = arith.constant 0 : i32
    %c0_i32_0 = arith.constant 0 : i32
    %c0_i32_1 = arith.constant 0 : i32
    return %c0_i32, %c0_i32_0 : i32, i32
  }
  func.func @transform_3(%arg0: i32) -> (i32, i32) {
    %c0_i32 = arith.constant 0 : i32
    %c0_i32_0 = arith.constant 0 : i32
    %c0_i32_1 = arith.constant 0 : i32
    return %c0_i32, %c0_i32_0 : i32, i32
  }
  func.func @transform_4(%arg0: i32) -> (i32, i32) {
    %c0_i32 = arith.constant 0 : i32
    %c0_i32_0 = arith.constant 0 : i32
    %c0_i32_1 = arith.constant 0 : i32
    return %c0_i32, %c0_i32_0 : i32, i32
  }
  func.func @transform_5(%arg0: i32) -> (i32, i32) {
    %c0_i32 = arith.constant 0 : i32
    %c0_i32_0 = arith.constant 0 : i32
    return %arg0, %c0_i32 : i32, i32
  }
}

</mosaic_0001>

<llo_original>
// kernel: tpu_custom_call.1
$region0: #{tpu_custom_call.1}
  #allocation0 [shape = 'u32[]', space=smem, size = 0x4, offset = 0x4, fixed_abs, tag = 'smem constant byte address 0x4 - core index']
  #allocation1 [shape = 'u32[144,128]{1,0:T(1,128)}', space=vmem, size = 0x12000, scoped, tag = 'internal scratch']
  %s0 = inlined_call_operand.hbm [shape: f32[1024,128], index: 0, kind: input, shape index: {}]
  %s1 = inlined_call_operand.hbm [shape: f32[128,512], index: 1, kind: input, shape index: {}]
  %s2 = inlined_call_operand.hbm [shape: f32[1,512], index: 2, kind: input, shape index: {}]
  %s3 = inlined_call_operand.hbm [shape: f32[512,128], index: 3, kind: input, shape index: {}]
  %s4 = inlined_call_operand.hbm [shape: f32[1,128], index: 4, kind: input, shape index: {}]
  %s5 = inlined_call_operand.hbm [shape: f32[1024,128], index: 5, kind: output, shape index: {}]
  %s6 = sld [smem:[#allocation0]]
  $region73: #{tpu_custom_call.1} parent=0
    _
  %s8 = ssub.s32 1, %s6
  %s9 = scalar_select 0, %s8, %s6
  $region1: #{tpu_custom_call.1} parent=0
    #allocation2 [shape = 'u8[262144]{0}', space=vmem, size = 0x40000, scoped, tag = 'input window, operand 0']
    #allocation3 [shape = 's32[2]{0}', space=sflag, size = 0x8, scoped, tag = 'scoped memory for tpu_custom_call.1']
    #allocation4 [shape = 's32[2]{0}', space=sflag, size = 0x8, scoped, tag = 'scoped memory for tpu_custom_call.1']
    #allocation5 [shape = 'u8[262144]{0}', space=vmem, size = 0x40000, scoped, tag = 'input window, operand 1, single buffered']
    #allocation6 [shape = 's32[1]{0}', space=sflag, size = 0x4, scoped, tag = 'scoped memory for tpu_custom_call.1']
    #allocation7 [shape = 'u8[2048]{0}', space=vmem, size = 0x800, scoped, tag = 'input window, operand 2, single buffered']
    #allocation8 [shape = 'u8[262144]{0}', space=vmem, size = 0x40000, scoped, tag = 'input window, operand 3, single buffered']
    #allocation9 [shape = 's32[1]{0}', space=sflag, size = 0x4, scoped, tag = 'scoped memory for tpu_custom_call.1']
    #allocation10 [shape = 'u8[512]{0}', space=vmem, size = 0x400, scoped, tag = 'input window, operand 4, single buffered']
    #allocation11 [shape = 'u8[262144]{0}', space=vmem, size = 0x40000, scoped, tag = 'output window, operand 0']
    %10 = vsyncpa [#allocation3], 0
    %s11 = scalar_lea.sflag [#allocation3], 1
    %12 = vsyncpa %s11, 0
    %13 = vsyncpa [#allocation6], 0
    %14 = vsyncpa [#allocation9], 0
    %15 = vsyncpa [#allocation4], 0
    %s16 = scalar_lea.sflag [#allocation4], 1
    %17 = vsyncpa %s16, 0
    loop: start=0, step=1, limit=6
    $region2: #{tpu_custom_call.1} parent=1 // loop_pre_header
      _
    $region3: #{tpu_custom_call.1} parent=1 // loop_header
      %s19 = sphi 0, %s23
      %p20 = scmp.ge.s32.totalorder %s19, 6
      %s29 = sphi 0, %s31
      %s32 = sphi 0, %s29
      %s33 = sphi 0, %s32
      %s49 = sphi 0, %s33
      %s53 = sphi 0, %s53
      %s55 = sphi 0, %s53
      %s56 = sphi 0, %s55
      %s70 = sphi 0, %s56
      %s74 = sphi 0, %s74
      %s76 = sphi 0, %s74
      %s77 = sphi 0, %s76
      %s91 = sphi 0, %s77
      %s95 = sphi 0, %s95
      %s97 = sphi 0, %s95
      %s98 = sphi 0, %s97
      %s112 = sphi 0, %s98
      %s116 = sphi 0, %s116
      %s118 = sphi 0, %s116
      %s119 = sphi 0, %s118
      %s133 = sphi 0, %s119
      %s139 = sphi 0, %s141
      %s142 = sphi 0, %s139
      %s143 = sphi 0, %s142
      %s159 = sphi 0, %s143
    $region4: #{tpu_custom_call.1} parent=1 // loop_header_branch
      %22 = sbr.rel (%p20) target = $region8
    $region5: #{tpu_custom_call.1} parent=1 // loop_body
      %s24 = ssub.s32 %s19, 1
      %s25 = ssub.s32 %s19, 2
      %s26 = sadd.s32 %s19, 1
      %s27 = ssub.s32 %s19, %s26
      %p28 = scmp.eq.s32.totalorder %s27, 0
      %s30 = sadd.s32 %s29, 1
      %s31 = scalar_select %p28, %s29, %s30
      %p34 = pneg %p28
      %p35 = scmp.eq.s32.totalorder %s19, 3
      %p36 = por %p34, %p35
      %p37 = scmp.ne.s32.totalorder %s29, %s32
      %p38 = scmp.eq.s32.totalorder %s19, 0
      %p39 = por %p37, %p38
      %p40 = scmp.ne.s32.totalorder %s29, %s32
      %p41 = scmp.eq.s32.totalorder %s24, 3
      %p42 = por %p40, %p41
      %p43 = scmp.ne.s32.totalorder %s32, %s33
      %p44 = scmp.eq.s32.totalorder %s24, 0
      %p45 = por %p43, %p44
      %p46 = scmp.ne.s32.totalorder %s32, %s33
      %p47 = scmp.eq.s32.totalorder %s25, 3
      %p48 = por %p46, %p47
      %p50 = scmp.ne.s32.totalorder %s33, %s49
      %p51 = scmp.eq.s32.totalorder %s25, 0
      %p52 = por %p50, %p51
      %s54 = sadd.s32 %s53, 1
      %p57 = scmp.eq.s32.totalorder %s19, 3
      %p58 = scmp.ne.s32.totalorder %s53, %s55
      %p59 = scmp.eq.s32.totalorder %s19, 0
      %p60 = por %p58, %p59
      %p61 = scmp.ne.s32.totalorder %s53, %s55
      %p62 = scmp.eq.s32.totalorder %s24, 3
      %p63 = por %p61, %p62
      %p64 = scmp.ne.s32.totalorder %s55, %s56
      %p65 = scmp.eq.s32.totalorder %s24, 0
      %p66 = por %p64, %p65
      %p67 = scmp.ne.s32.totalorder %s55, %s56
      %p68 = scmp.eq.s32.totalorder %s25, 3
      %p69 = por %p67, %p68
      %p71 = scmp.ne.s32.totalorder %s56, %s70
      %p72 = scmp.eq.s32.totalorder %s25, 0
      %p73 = por %p71, %p72
      %s75 = sadd.s32 %s74, 1
      %p78 = scmp.eq.s32.totalorder %s19, 3
      %p79 = scmp.ne.s32.totalorder %s74, %s76
      %p80 = scmp.eq.s32.totalorder %s19, 0
      %p81 = por %p79, %p80
      %p82 = scmp.ne.s32.totalorder %s74, %s76
      %p83 = scmp.eq.s32.totalorder %s24, 3
      %p84 = por %p82, %p83
      %p85 = scmp.ne.s32.totalorder %s76, %s77
      %p86 = scmp.eq.s32.totalorder %s24, 0
      %p87 = por %p85, %p86
      %p88 = scmp.ne.s32.totalorder %s76, %s77
      %p89 = scmp.eq.s32.totalorder %s25, 3
      %p90 = por %p88, %p89
      %p92 = scmp.ne.s32.totalorder %s77, %s91
      %p93 = scmp.eq.s32.totalorder %s25, 0
      %p94 = por %p92, %p93
      %s96 = sadd.s32 %s95, 1
      %p99 = scmp.eq.s32.totalorder %s19, 3
      %p100 = scmp.ne.s32.totalorder %s95, %s97
      %p101 = scmp.eq.s32.totalorder %s19, 0
      %p102 = por %p100, %p101
      %p103 = scmp.ne.s32.totalorder %s95, %s97
      %p104 = scmp.eq.s32.totalorder %s24, 3
      %p105 = por %p103, %p104
      %p106 = scmp.ne.s32.totalorder %s97, %s98
      %p107 = scmp.eq.s32.totalorder %s24, 0
      %p108 = por %p106, %p107
      %p109 = scmp.ne.s32.totalorder %s97, %s98
      %p110 = scmp.eq.s32.totalorder %s25, 3
      %p111 = por %p109, %p110
      %p113 = scmp.ne.s32.totalorder %s98, %s112
      %p114 = scmp.eq.s32.totalorder %s25, 0
      %p115 = por %p113, %p114
      %s117 = sadd.s32 %s116, 1
      %p120 = scmp.eq.s32.totalorder %s19, 3
      %p121 = scmp.ne.s32.totalorder %s116, %s118
      %p122 = scmp.eq.s32.totalorder %s19, 0
      %p123 = por %p121, %p122
      %p124 = scmp.ne.s32.totalorder %s116, %s118
      %p125 = scmp.eq.s32.totalorder %s24, 3
      %p126 = por %p124, %p125
      %p127 = scmp.ne.s32.totalorder %s118, %s119
      %p128 = scmp.eq.s32.totalorder %s24, 0
      %p129 = por %p127, %p128
      %p130 = scmp.ne.s32.totalorder %s118, %s119
      %p131 = scmp.eq.s32.totalorder %s25, 3
      %p132 = por %p130, %p131
      %p134 = scmp.ne.s32.totalorder %s119, %s133
      %p135 = scmp.eq.s32.totalorder %s25, 0
      %p136 = por %p134, %p135
      %s137 = ssub.s32 %s19, %s26
      %p138 = scmp.eq.s32.totalorder %s137, 0
      %s140 = sadd.s32 %s139, 1
      %s141 = scalar_select %p138, %s139, %s140
      %p144 = pneg %p138
      %p145 = scmp.eq.s32.totalorder %s19, 3
      %p146 = por %p144, %p145
      %p147 = scmp.ne.s32.totalorder %s139, %s142
      %p148 = scmp.eq.s32.totalorder %s19, 0
      %p149 = por %p147, %p148
      %p150 = scmp.ne.s32.totalorder %s139, %s142
      %p151 = scmp.eq.s32.totalorder %s24, 3
      %p152 = por %p150, %p151
      %p153 = scmp.ne.s32.totalorder %s142, %s143
      %p154 = scmp.eq.s32.totalorder %s24, 0
      %p155 = por %p153, %p154
      %p156 = scmp.ne.s32.totalorder %s142, %s143
      %p157 = scmp.eq.s32.totalorder %s25, 3
      %p158 = por %p156, %p157
      %p160 = scmp.ne.s32.totalorder %s143, %s159
      %p161 = scmp.eq.s32.totalorder %s25, 0
      %p162 = por %p160, %p161
      %p163 = scmp.le.s32.totalorder 1, %s19
      %p164 = scmp.lt.s32.totalorder %s19, 5
      %p165 = pnand %p163, %p164
      %p166 = pneg %p165
      // Predicated region
      $region9: #{tpu_custom_call.1} parent=5 // pred_check
        _
      $region10: #{tpu_custom_call.1} parent=5 // pred_check_branch
        %168 = sbr.rel (%p165) target = $region12
      $region11: #{tpu_custom_call.1} parent=5 // pred_region
        %s169 = ssub.s32 %s19, 1
        // Predicated region
        $region13: #{tpu_custom_call.1} parent=11 // pred_check
          %p170 = pneg %p66
        $region14: #{tpu_custom_call.1} parent=11 // pred_check_branch
          %172 = sbr.rel (%p170) target = $region16
        $region15: #{tpu_custom_call.1} parent=11 // pred_region
          %s174 = ssub.s32 8192, 8192
          %175 = vsyncadd [#allocation6], %s174
          %s176 = sshll.u32 [#allocation5], 4
          %s177 = int_to_ptr.vmem [resolvable:$true] %s176
          %182 = dma.hbm_to_vmem [thread:$0]  %s1, 8192, %s177, [#allocation6], 512, 512, 32
        $region16: #{tpu_custom_call.1} parent=11 // pred_fallthru
          _
        // Predicated region
        $region17: #{tpu_custom_call.1} parent=11 // pred_check
          %p183 = pneg %p87
        $region18: #{tpu_custom_call.1} parent=11 // pred_check_branch
          %185 = sbr.rel (%p183) target = $region20
        $region19: #{tpu_custom_call.1} parent=11 // pred_region
          %s187 = ssub.s32 64, 64
          %188 = vsyncadd [#allocation6], %s187
          %s190 = sshll.u32 [#allocation7], 4
          %s191 = int_to_ptr.vmem [resolvable:$true] %s190
          %193 = dma.hbm_to_vmem [thread:$0]  %s2, 64, %s191, [#allocation6]
        $region20: #{tpu_custom_call.1} parent=11 // pred_fallthru
          _
        // Predicated region
        $region21: #{tpu_custom_call.1} parent=11 // pred_check
          %p194 = pneg %p108
        $region22: #{tpu_custom_call.1} parent=11 // pred_check_branch
          %196 = sbr.rel (%p194) target = $region24
        $region23: #{tpu_custom_call.1} parent=11 // pred_region
          %s198 = ssub.s32 8192, 8192
          %199 = vsyncadd [#allocation9], %s198
          %s200 = sshll.u32 [#allocation8], 4
          %s201 = int_to_ptr.vmem [resolvable:$true] %s200
          %206 = dma.hbm_to_vmem [thread:$0]  %s3, 8192, %s201, [#allocation9], 128, 128, 8
        $region24: #{tpu_custom_call.1} parent=11 // pred_fallthru
          _
        // Predicated region
        $region25: #{tpu_custom_call.1} parent=11 // pred_check
          %p207 = pneg %p129
        $region26: #{tpu_custom_call.1} parent=11 // pred_check_branch
          %209 = sbr.rel (%p207) target = $region28
        $region27: #{tpu_custom_call.1} parent=11 // pred_region
          %s211 = ssub.s32 16, 16
          %212 = vsyncadd [#allocation9], %s211
          %s214 = sshll.u32 [#allocation10], 4
          %s215 = int_to_ptr.vmem [resolvable:$true] %s214
          %217 = dma.hbm_to_vmem [thread:$0]  %s4, 16, %s215, [#allocation9]
        $region28: #{tpu_custom_call.1} parent=11 // pred_fallthru
          _
      $region12: #{tpu_custom_call.1} parent=5 // pred_fallthru
        _
      %p218 = scmp.lt.s32.totalorder %s19, 4
      // Predicated region
      $region29: #{tpu_custom_call.1} parent=5 // pred_check
        %p219 = pneg %p218
      $region30: #{tpu_custom_call.1} parent=5 // pred_check_branch
        %221 = sbr.rel (%p219) target = $region32
      $region31: #{tpu_custom_call.1} parent=5 // pred_region
        // Predicated region
        $region33: #{tpu_custom_call.1} parent=31 // pred_check
          %p222 = pneg %p39
        $region34: #{tpu_custom_call.1} parent=31 // pred_check_branch
          %224 = sbr.rel (%p222) target = $region36
        $region35: #{tpu_custom_call.1} parent=31 // pred_region
          %s225 = sand.u32 %s29, 1
          %s226 = scalar_lea.sflag [#allocation3], %s225
          %s227 = sand.u32 %s29, 1
          %s228 = smul.addr %s227, 256
          %s229 = scalar_lea.vmem [#allocation2], %s228
          %s230 = smul.u32 32, %s19
          %s232 = ssub.s32 4096, 4096
          %233 = vsyncadd %s226, %s232
          %s234 = smul.addr %s230, 128
          %s235 = scalar_lea.hbm %s0, %s234
          %s236 = sshll.u32 %s229, 4
          %s237 = int_to_ptr.vmem [resolvable:$true] %s236
          %242 = dma.hbm_to_vmem [thread:$0]  %s235, 4096, %s237, %s226, 128, 128, 8
        $region36: #{tpu_custom_call.1} parent=31 // pred_fallthru
          _
      $region32: #{tpu_custom_call.1} parent=5 // pred_fallthru
        _
      %p243 = scmp.le.s32.totalorder 1, %s19
      %p244 = scmp.lt.s32.totalorder %s19, 5
      %p245 = pnand %p243, %p244
      %p246 = pneg %p245
      // Predicated region
      $region37: #{tpu_custom_call.1} parent=5 // pred_check
        _
      $region38: #{tpu_custom_call.1} parent=5 // pred_check_branch
        %248 = sbr.rel (%p245) target = $region40
      $region39: #{tpu_custom_call.1} parent=5 // pred_region
        %s249 = ssub.s32 %s19, 1
        %s250 = sand.u32 %s32, 1
        %s251 = scalar_lea.sflag [#allocation3], %s250
        %s252 = sand.u32 %s32, 1
        %s253 = smul.addr %s252, 256
        %s254 = scalar_lea.vmem [#allocation2], %s253
        // Predicated region
        $region41: #{tpu_custom_call.1} parent=39 // pred_check
          %p255 = pneg %p45
        $region42: #{tpu_custom_call.1} parent=39 // pred_check_branch
          %257 = sbr.rel (%p255) target = $region44
        $region43: #{tpu_custom_call.1} parent=39 // pred_region
          %258 = dma.done %s251, 4096
        $region44: #{tpu_custom_call.1} parent=39 // pred_fallthru
          _
        // Predicated region
        $region45: #{tpu_custom_call.1} parent=39 // pred_check
          %p259 = pneg %p66
        $region46: #{tpu_custom_call.1} parent=39 // pred_check_branch
          %261 = sbr.rel (%p259) target = $region48
        $region47: #{tpu_custom_call.1} parent=39 // pred_region
          %262 = dma.done [#allocation6], 8192
        $region48: #{tpu_custom_call.1} parent=39 // pred_fallthru
          _
        // Predicated region
        $region49: #{tpu_custom_call.1} parent=39 // pred_check
          %p263 = pneg %p87
        $region50: #{tpu_custom_call.1} parent=39 // pred_check_branch
          %265 = sbr.rel (%p263) target = $region52
        $region51: #{tpu_custom_call.1} parent=39 // pred_region
          %266 = dma.done [#allocation6], 64
        $region52: #{tpu_custom_call.1} parent=39 // pred_fallthru
          _
        // Predicated region
        $region53: #{tpu_custom_call.1} parent=39 // pred_check
          %p267 = pneg %p108
        $region54: #{tpu_custom_call.1} parent=39 // pred_check_branch
          %269 = sbr.rel (%p267) target = $region56
        $region55: #{tpu_custom_call.1} parent=39 // pred_region
          %270 = dma.done [#allocation9], 8192
        $region56: #{tpu_custom_call.1} parent=39 // pred_fallthru
          _
        // Predicated region
        $region57: #{tpu_custom_call.1} parent=39 // pred_check
          %p271 = pneg %p129
        $region58: #{tpu_custom_call.1} parent=39 // pred_check_branch
          %273 = sbr.rel (%p271) target = $region60
        $region59: #{tpu_custom_call.1} parent=39 // pred_region
          %274 = dma.done [#allocation9], 16
        $region60: #{tpu_custom_call.1} parent=39 // pred_fallthru
          _
        %s275 = sand.u32 %s32, 1
        %s276 = scalar_lea.sflag [#allocation3], %s275
        %s277 = sand.u32 %s32, 1
        %s278 = smul.addr %s277, 256
        %s279 = scalar_lea.vmem [#allocation2], %s278
        %p280 = pneg %p45
        %p281 = pneg %p42
        %p282 = pneg %p66
        %p283 = pneg %p63
        %p284 = pneg %p87
        %p285 = pneg %p84
        %p286 = pneg %p108
        %p287 = pneg %p105
        %p288 = pneg %p129
        %p289 = pneg %p126
        %p290 = pneg %p155
        %p291 = pneg %p152
        %s292 = sand.u32 %s142, 1
        %s293 = scalar_lea.sflag [#allocation4], %s292
        %s294 = sand.u32 %s142, 1
        %s295 = smul.addr %s294, 256
        %s296 = scalar_lea.vmem [#allocation11], %s295
        %s297 = smul.u32 32, %s24
        %s298 = smul.u32 32, %s24
        %v299 = vld [vmem:[%s254] sm:$0xff]
        %v300 = vld [vmem:[%s254 + $0x8] sm:$0xff]
        %v301 = vld [vmem:[%s254 + $0x10] sm:$0xff]
        %v302 = vld [vmem:[%s254 + $0x18] sm:$0xff]
        %v303 = vld [vmem:[%s254 + $0x20] sm:$0xff]
        %v304 = vld [vmem:[%s254 + $0x28] sm:$0xff]
        %v305 = vld [vmem:[%s254 + $0x30] sm:$0xff]
        %v306 = vld [vmem:[%s254 + $0x38] sm:$0xff]
        %v307 = vld [vmem:[%s254 + $0x40] sm:$0xff]
        %v308 = vld [vmem:[%s254 + $0x48] sm:$0xff]
        %v309 = vld [vmem:[%s254 + $0x50] sm:$0xff]
        %v310 = vld [vmem:[%s254 + $0x58] sm:$0xff]
        %v311 = vld [vmem:[%s254 + $0x60] sm:$0xff]
        %v312 = vld [vmem:[%s254 + $0x68] sm:$0xff]
        %v313 = vld [vmem:[%s254 + $0x70] sm:$0xff]
        %v314 = vld [vmem:[%s254 + $0x78] sm:$0xff]
        %v315 = vld [vmem:[%s254 + $0x80] sm:$0xff]
        %v316 = vld [vmem:[%s254 + $0x88] sm:$0xff]
        %v317 = vld [vmem:[%s254 + $0x90] sm:$0xff]
        %v318 = vld [vmem:[%s254 + $0x98] sm:$0xff]
        %v319 = vld [vmem:[%s254 + $0xa0] sm:$0xff]
        %v320 = vld [vmem:[%s254 + $0xa8] sm:$0xff]
        %v321 = vld [vmem:[%s254 + $0xb0] sm:$0xff]
        %v322 = vld [vmem:[%s254 + $0xb8] sm:$0xff]
        %v323 = vld [vmem:[%s254 + $0xc0] sm:$0xff]
        %v324 = vld [vmem:[%s254 + $0xc8] sm:$0xff]
        %v325 = vld [vmem:[%s254 + $0xd0] sm:$0xff]
        %v326 = vld [vmem:[%s254 + $0xd8] sm:$0xff]
        %v327 = vld [vmem:[%s254 + $0xe0] sm:$0xff]
        %v328 = vld [vmem:[%s254 + $0xe8] sm:$0xff]
        %v329 = vld [vmem:[%s254 + $0xf0] sm:$0xff]
        %v330 = vld [vmem:[%s254 + $0xf8] sm:$0xff]
        %v331 = vld [vmem:[#allocation5] sm:$0xff]
        %v332 = vld [vmem:[#allocation5 + $0x8] sm:$0xff]
        %v333 = vld [vmem:[#allocation5 + $0x10] sm:$0xff]
        %v334 = vld [vmem:[#allocation5 + $0x18] sm:$0xff]
        %v335 = vld [vmem:[#allocation5 + $0x20] sm:$0xff]
        %v336 = vld [vmem:[#allocation5 + $0x28] sm:$0xff]
        %v337 = vld [vmem:[#allocation5 + $0x30] sm:$0xff]
        %v338 = vld [vmem:[#allocation5 + $0x38] sm:$0xff]
        %v339 = vld [vmem:[#allocation5 + $0x40] sm:$0xff]
        %v340 = vld [vmem:[#allocation5 + $0x48] sm:$0xff]
        %v341 = vld [vmem:[#allocation5 + $0x50] sm:$0xff]
        %v342 = vld [vmem:[#allocation5 + $0x58] sm:$0xff]
        %v343 = vld [vmem:[#allocation5 + $0x60] sm:$0xff]
        %v344 = vld [vmem:[#allocation5 + $0x68] sm:$0xff]
        %v345 = vld [vmem:[#allocation5 + $0x70] sm:$0xff]
        %v346 = vld [vmem:[#allocation5 + $0x78] sm:$0xff]
        %v347 = vld [vmem:[#allocation5 + $0x80] sm:$0xff]
        %v348 = vld [vmem:[#allocation5 + $0x88] sm:$0xff]
        %v349 = vld [vmem:[#allocation5 + $0x90] sm:$0xff]
        %v350 = vld [vmem:[#allocation5 + $0x98] sm:$0xff]
        %v351 = vld [vmem:[#allocation5 + $0xa0] sm:$0xff]
        %v352 = vld [vmem:[#allocation5 + $0xa8] sm:$0xff]
        %v353 = vld [vmem:[#allocation5 + $0xb0] sm:$0xff]
        %v354 = vld [vmem:[#allocation5 + $0xb8] sm:$0xff]
        %v355 = vld [vmem:[#allocation5 + $0xc0] sm:$0xff]
        %v356 = vld [vmem:[#allocation5 + $0xc8] sm:$0xff]
        %v357 = vld [vmem:[#allocation5 + $0xd0] sm:$0xff]
        %v358 = vld [vmem:[#allocation5 + $0xd8] sm:$0xff]
        %v359 = vld [vmem:[#allocation5 + $0xe0] sm:$0xff]
        %v360 = vld [vmem:[#allocation5 + $0xe8] sm:$0xff]
        %v361 = vld [vmem:[#allocation5 + $0xf0] sm:$0xff]
        %v362 = vld [vmem:[#allocation5 + $0xf8] sm:$0xff]
        %v363 = vld [vmem:[#allocation5 + $0x100] sm:$0xff]
        %v364 = vld [vmem:[#allocation5 + $0x108] sm:$0xff]
        %v365 = vld [vmem:[#allocation5 + $0x110] sm:$0xff]
        %v366 = vld [vmem:[#allocation5 + $0x118] sm:$0xff]
        %v367 = vld [vmem:[#allocation5 + $0x120] sm:$0xff]
        %v368 = vld [vmem:[#allocation5 + $0x128] sm:$0xff]
        %v369 = vld [vmem:[#allocation5 + $0x130] sm:$0xff]
        %v370 = vld [vmem:[#allocation5 + $0x138] sm:$0xff]
        %v371 = vld [vmem:[#allocation5 + $0x140] sm:$0xff]
        %v372 = vld [vmem:[#allocation5 + $0x148] sm:$0xff]
        %v373 = vld [vmem:[#allocation5 + $0x150] sm:$0xff]
        %v374 = vld [vmem:[#allocation5 + $0x158] sm:$0xff]
        %v375 = vld [vmem:[#allocation5 + $0x160] sm:$0xff]
        %v376 = vld [vmem:[#allocation5 + $0x168] sm:$0xff]
        %v377 = vld [vmem:[#allocation5 + $0x170] sm:$0xff]
        %v378 = vld [vmem:[#allocation5 + $0x178] sm:$0xff]
        %v379 = vld [vmem:[#allocation5 + $0x180] sm:$0xff]
        %v380 = vld [vmem:[#allocation5 + $0x188] sm:$0xff]
        %v381 = vld [vmem:[#allocation5 + $0x190] sm:$0xff]
        %v382 = vld [vmem:[#allocation5 + $0x198] sm:$0xff]
        %v383 = vld [vmem:[#allocation5 + $0x1a0] sm:$0xff]
        %v384 = vld [vmem:[#allocation5 + $0x1a8] sm:$0xff]
        %v385 = vld [vmem:[#allocation5 + $0x1b0] sm:$0xff]
        %v386 = vld [vmem:[#allocation5 + $0x1b8] sm:$0xff]
        %v387 = vld [vmem:[#allocation5 + $0x1c0] sm:$0xff]
        %v388 = vld [vmem:[#allocation5 + $0x1c8] sm:$0xff]
        %v389 = vld [vmem:[#allocation5 + $0x1d0] sm:$0xff]
        %v390 = vld [vmem:[#allocation5 + $0x1d8] sm:$0xff]
        %v391 = vld [vmem:[#allocation5 + $0x1e0] sm:$0xff]
        %v392 = vld [vmem:[#allocation5 + $0x1e8] sm:$0xff]
        %v393 = vld [vmem:[#allocation5 + $0x1f0] sm:$0xff]
        %v394 = vld [vmem:[#allocation5 + $0x1f8] sm:$0xff]
        %v395 = vld [vmem:[#allocation7] sm:$0xf]
        %v397 = vlaneseq
        %v398 = vshrl.u32 %v397, 7
        %v399 = vsub.s32 0, %v398
        %v400 = vrot.slane %v395, %v399
        %v401 = vlaneseq
        %v402 = vshrl.u32 %v401, 7
        %v403 = vsub.s32 1, %v402
        %v404 = vrot.slane %v395, %v403
        %v405 = vlaneseq
        %v406 = vshrl.u32 %v405, 7
        %v407 = vsub.s32 2, %v406
        %v408 = vrot.slane %v395, %v407
        %v409 = vlaneseq
        %v410 = vshrl.u32 %v409, 7
        %v411 = vsub.s32 3, %v410
        %v412 = vrot.slane %v395, %v411
        %417 = vmatprep.subr.mxu0 %v332
        %418 = vmatpush1.msra.mxu0 %v331
        %419 = vmatprep.subr.mxu0 %v336
        %420 = vmatpush1.msra.mxu0 %v335
        %421 = vmatprep.subr.mxu0 %v340
        %422 = vmatpush1.msra.mxu0 %v339
        %423 = vmatprep.subr.mxu0 %v344
        %424 = vmatpush1.msra.mxu0 %v343
        %425 = vmatprep.subr.mxu0 %v348
        %426 = vmatpush1.msra.mxu0 %v347
        %427 = vmatprep.subr.mxu0 %v352
        %428 = vmatpush1.msra.mxu0 %v351
        %429 = vmatprep.subr.mxu0 %v356
        %430 = vmatpush1.msra.mxu0 %v355
        %431 = vmatprep.subr.mxu0 %v360
        %432 = vmatpush1.msra.mxu0 %v359
        %433 = vmatprep.subr.mxu0 %v364
        %434 = vmatpush1.msra.mxu0 %v363
        %435 = vmatprep.subr.mxu0 %v368
        %436 = vmatpush1.msra.mxu0 %v367
        %437 = vmatprep.subr.mxu0 %v372
        %438 = vmatpush1.msra.mxu0 %v371
        %439 = vmatprep.subr.mxu0 %v376
        %440 = vmatpush1.msra.mxu0 %v375
        %441 = vmatprep.subr.mxu0 %v380
        %442 = vmatpush1.msra.mxu0 %v379
        %443 = vmatprep.subr.mxu0 %v384
        %444 = vmatpush1.msra.mxu0 %v383
        %445 = vmatprep.subr.mxu0 %v388
        %446 = vmatpush1.msra.mxu0 %v387
        %447 = vmatprep.subr.mxu0 %v392
        %448 = vmatpush1.msra.mxu0 %v391
        %449 = vmatprep.subr.mxu0 0.0
        %450 = vmatpush1.msra.mxu0 0.0
        %451 = vmatprep.subr.mxu0 0.0
        %452 = vmatpush1.msra.mxu0 0.0
        %453 = vmatprep.subr.mxu0 0.0
        %454 = vmatpush1.msra.mxu0 0.0
        %455 = vmatprep.subr.mxu0 0.0
        %456 = vmatpush1.msra.mxu0 0.0
        %457 = vmatprep.subr.mxu0 0.0
        %458 = vmatpush1.msra.mxu0 0.0
        %459 = vmatprep.subr.mxu0 0.0
        %460 = vmatpush1.msra.mxu0 0.0
        %461 = vmatprep.subr.mxu0 0.0
        %462 = vmatpush1.msra.mxu0 0.0
        %463 = vmatprep.subr.mxu0 0.0
        %464 = vmatpush1.msra.mxu0 0.0
        %465 = vmatprep.subr.mxu0 0.0
        %466 = vmatpush1.msra.mxu0 0.0
        %467 = vmatprep.subr.mxu0 0.0
        %468 = vmatpush1.msra.mxu0 0.0
        %469 = vmatprep.subr.mxu0 0.0
        %470 = vmatpush1.msra.mxu0 0.0
        %471 = vmatprep.subr.mxu0 0.0
        %472 = vmatpush1.msra.mxu0 0.0
        %473 = vmatprep.subr.mxu0 0.0
        %474 = vmatpush1.msra.mxu0 0.0
        %475 = vmatprep.subr.mxu0 0.0
        %476 = vmatpush1.msra.mxu0 0.0
        %477 = vmatprep.subr.mxu0 0.0
        %478 = vmatpush1.msra.mxu0 0.0
        %479 = vmatprep.subr.mxu0 0.0
        %480 = vmatpush1.msra.mxu0 0.0
        %481 = vmatprep.mubr.f32.mxu0 0.0
        %482 = vmatmul.mubr.f32.gmra.mrb[0].mxu0 %v299
        %v483 = vpop.f32.mrb[0].mxu0
        %v484 = vadd.f32 %v400, %v483
        %v485 = vpop.f32.mrb[0].mxu0
        %v486 = vadd.f32 %v404, %v485
        %487 = vmatprep.mubr.f32.mxu0 0.0
        %488 = vmatmul.mubr.f32.gmra.mrb[0].mxu0 %v300
        %v489 = vpop.f32.mrb[0].mxu0
        %v490 = vadd.f32 %v400, %v489
        %v491 = vpop.f32.mrb[0].mxu0
        %v492 = vadd.f32 %v404, %v491
        %493 = vmatprep.mubr.f32.mxu0 0.0
        %494 = vmatmul.mubr.f32.gmra.mrb[0].mxu0 %v301
        %v495 = vpop.f32.mrb[0].mxu0
        %v496 = vadd.f32 %v400, %v495
        %v497 = vpop.f32.mrb[0].mxu0
        %v498 = vadd.f32 %v404, %v497
        %499 = vmatprep.mubr.f32.mxu0 0.0
        %500 = vmatmul.mubr.f32.gmra.mrb[0].mxu0 %v302
        %v501 = vpop.f32.mrb[0].mxu0
        %v502 = vadd.f32 %v400, %v501
        %v503 = vpop.f32.mrb[0].mxu0
        %v504 = vadd.f32 %v404, %v503
        %505 = vmatprep.mubr.f32.mxu0 0.0
        %506 = vmatmul.mubr.f32.gmra.mrb[0].mxu0 %v303
        %v507 = vpop.f32.mrb[0].mxu0
        %v508 = vadd.f32 %v400, %v507
        %v509 = vpop.f32.mrb[0].mxu0
        %v510 = vadd.f32 %v404, %v509
        %511 = vmatprep.mubr.f32.mxu0 0.0
        %512 = vmatmul.mubr.f32.gmra.mrb[0].mxu0 %v304
        %v513 = vpop.f32.mrb[0].mxu0
        %v514 = vadd.f32 %v400, %v513
        %v515 = vpop.f32.mrb[0].mxu0
        %v516 = vadd.f32 %v404, %v515
        %517 = vmatprep.mubr.f32.mxu0 0.0
        %518 = vmatmul.mubr.f32.gmra.mrb[0].mxu0 %v305
        %v519 = vpop.f32.mrb[0].mxu0
        %v520 = vadd.f32 %v400, %v519
        %v521 = vpop.f32.mrb[0].mxu0
        %v522 = vadd.f32 %v404, %v521
        %523 = vmatprep.mubr.f32.mxu0 0.0
        %524 = vmatmul.mubr.f32.gmra.mrb[0].mxu0 %v306
        %v525 = vpop.f32.mrb[0].mxu0
        %v526 = vadd.f32 %v400, %v525
        %v527 = vpop.f32.mrb[0].mxu0
        %v528 = vadd.f32 %v404, %v527
        %529 = vmatprep.mubr.f32.mxu0 0.0
        %530 = vmatmul.mubr.f32.gmra.mrb[0].mxu0 %v307
        %v531 = vpop.f32.mrb[0].mxu0
        %v532 = vadd.f32 %v400, %v531
        %v533 = vpop.f32.mrb[0].mxu0
        %v534 = vadd.f32 %v404, %v533
        %535 = vmatprep.mubr.f32.mxu0 0.0
        %536 = vmatmul.mubr.f32.gmra.mrb[0].mxu0 %v308
        %v537 = vpop.f32.mrb[0].mxu0
        %v538 = vadd.f32 %v400, %v537
        %v539 = vpop.f32.mrb[0].mxu0
        %v540 = vadd.f32 %v404, %v539
        %541 = vmatprep.mubr.f32.mxu0 0.0
        %542 = vmatmul.mubr.f32.gmra.mrb[0].mxu0 %v309
        %v543 = vpop.f32.mrb[0].mxu0
        %v544 = vadd.f32 %v400, %v543
        %v545 = vpop.f32.mrb[0].mxu0
        %v546 = vadd.f32 %v404, %v545
        %547 = vmatprep.mubr.f32.mxu0 0.0
        %548 = vmatmul.mubr.f32.gmra.mrb[0].mxu0 %v310
        %v549 = vpop.f32.mrb[0].mxu0
        %v550 = vadd.f32 %v400, %v549
        %v551 = vpop.f32.mrb[0].mxu0
        %v552 = vadd.f32 %v404, %v551
        %553 = vmatprep.mubr.f32.mxu0 0.0
        %554 = vmatmul.mubr.f32.gmra.mrb[0].mxu0 %v311
        %v555 = vpop.f32.mrb[0].mxu0
        %v556 = vadd.f32 %v400, %v555
        %v557 = vpop.f32.mrb[0].mxu0
        %v558 = vadd.f32 %v404, %v557
        %559 = vmatprep.mubr.f32.mxu0 0.0
        %560 = vmatmul.mubr.f32.gmra.mrb[0].mxu0 %v312
        %v561 = vpop.f32.mrb[0].mxu0
        %v562 = vadd.f32 %v400, %v561
        %v563 = vpop.f32.mrb[0].mxu0
        %v564 = vadd.f32 %v404, %v563
        %565 = vmatprep.mubr.f32.mxu0 0.0
        %566 = vmatmul.mubr.f32.gmra.mrb[0].mxu0 %v313
        %v567 = vpop.f32.mrb[0].mxu0
        %v568 = vadd.f32 %v400, %v567
        %v569 = vpop.f32.mrb[0].mxu0
        %v570 = vadd.f32 %v404, %v569
        %571 = vmatprep.mubr.f32.mxu0 0.0
        %572 = vmatmul.mubr.f32.gmra.mrb[0].mxu0 %v314
        %v573 = vpop.f32.mrb[0].mxu0
        %v574 = vadd.f32 %v400, %v573
        %v575 = vpop.f32.mrb[0].mxu0
        %v576 = vadd.f32 %v404, %v575
        %577 = vmatprep.mubr.f32.mxu0 0.0
        %578 = vmatmul.mubr.f32.gmra.mrb[0].mxu0 %v315
        %v579 = vpop.f32.mrb[0].mxu0
        %v580 = vadd.f32 %v400, %v579
        %v581 = vpop.f32.mrb[0].mxu0
        %v582 = vadd.f32 %v404, %v581
        %583 = vmatprep.mubr.f32.mxu0 0.0
        %584 = vmatmul.mubr.f32.gmra.mrb[0].mxu0 %v316
        %v585 = vpop.f32.mrb[0].mxu0
        %v586 = vadd.f32 %v400, %v585
        %v587 = vpop.f32.mrb[0].mxu0
        %v588 = vadd.f32 %v404, %v587
        %589 = vmatprep.mubr.f32.mxu0 0.0
        %590 = vmatmul.mubr.f32.gmra.mrb[0].mxu0 %v317
        %v591 = vpop.f32.mrb[0].mxu0
        %v592 = vadd.f32 %v400, %v591
        %v593 = vpop.f32.mrb[0].mxu0
        %v594 = vadd.f32 %v404, %v593
        %595 = vmatprep.mubr.f32.mxu0 0.0
        %596 = vmatmul.mubr.f32.gmra.mrb[0].mxu0 %v318
        %v597 = vpop.f32.mrb[0].mxu0
        %v598 = vadd.f32 %v400, %v597
        %v599 = vpop.f32.mrb[0].mxu0
        %v600 = vadd.f32 %v404, %v599
        %601 = vmatprep.mubr.f32.mxu0 0.0
        %602 = vmatmul.mubr.f32.gmra.mrb[0].mxu0 %v319
        %v603 = vpop.f32.mrb[0].mxu0
        %v604 = vadd.f32 %v400, %v603
        %v605 = vpop.f32.mrb[0].mxu0
        %v606 = vadd.f32 %v404, %v605
        %607 = vmatprep.mubr.f32.mxu0 0.0
        %608 = vmatmul.mubr.f32.gmra.mrb[0].mxu0 %v320
        %v609 = vpop.f32.mrb[0].mxu0
        %v610 = vadd.f32 %v400, %v609
        %v611 = vpop.f32.mrb[0].mxu0
        %v612 = vadd.f32 %v404, %v611
        %613 = vmatprep.mubr.f32.mxu0 0.0
        %614 = vmatmul.mubr.f32.gmra.mrb[0].mxu0 %v321
        %v615 = vpop.f32.mrb[0].mxu0
        %v616 = vadd.f32 %v400, %v615
        %v617 = vpop.f32.mrb[0].mxu0
        %v618 = vadd.f32 %v404, %v617
        %619 = vmatprep.mubr.f32.mxu0 0.0
        %620 = vmatmul.mubr.f32.gmra.mrb[0].mxu0 %v322
        %v621 = vpop.f32.mrb[0].mxu0
        %v622 = vadd.f32 %v400, %v621
        %v623 = vpop.f32.mrb[0].mxu0
        %v624 = vadd.f32 %v404, %v623
        %625 = vmatprep.mubr.f32.mxu0 0.0
        %626 = vmatmul.mubr.f32.gmra.mrb[0].mxu0 %v323
        %v627 = vpop.f32.mrb[0].mxu0
        %v628 = vadd.f32 %v400, %v627
        %v629 = vpop.f32.mrb[0].mxu0
        %v630 = vadd.f32 %v404, %v629
        %631 = vmatprep.mubr.f32.mxu0 0.0
        %632 = vmatmul.mubr.f32.gmra.mrb[0].mxu0 %v324
        %v633 = vpop.f32.mrb[0].mxu0
        %v634 = vadd.f32 %v400, %v633
        %v635 = vpop.f32.mrb[0].mxu0
        %v636 = vadd.f32 %v404, %v635
        %637 = vmatprep.mubr.f32.mxu0 0.0
        %638 = vmatmul.mubr.f32.gmra.mrb[0].mxu0 %v325
        %v639 = vpop.f32.mrb[0].mxu0
        %v640 = vadd.f32 %v400, %v639
        %v641 = vpop.f32.mrb[0].mxu0
        %v642 = vadd.f32 %v404, %v641
        %643 = vmatprep.mubr.f32.mxu0 0.0
        %644 = vmatmul.mubr.f32.gmra.mrb[0].mxu0 %v326
        %v645 = vpop.f32.mrb[0].mxu0
        %v646 = vadd.f32 %v400, %v645
        %v647 = vpop.f32.mrb[0].mxu0
        %v648 = vadd.f32 %v404, %v647
        %649 = vmatprep.mubr.f32.mxu0 0.0
        %650 = vmatmul.mubr.f32.gmra.mrb[0].mxu0 %v327
        %v651 = vpop.f32.mrb[0].mxu0
        %v652 = vadd.f32 %v400, %v651
        %v653 = vpop.f32.mrb[0].mxu0
        %v654 = vadd.f32 %v404, %v653
        %655 = vmatprep.mubr.f32.mxu0 0.0
        %656 = vmatmul.mubr.f32.gmra.mrb[0].mxu0 %v328
        %v657 = vpop.f32.mrb[0].mxu0
        %v658 = vadd.f32 %v400, %v657
        %v659 = vpop.f32.mrb[0].mxu0
        %v660 = vadd.f32 %v404, %v659
        %661 = vmatprep.mubr.f32.mxu0 0.0
        %662 = vmatmul.mubr.f32.gmra.mrb[0].mxu0 %v329
        %v663 = vpop.f32.mrb[0].mxu0
        %v664 = vadd.f32 %v400, %v663
        %v665 = vpop.f32.mrb[0].mxu0
        %v666 = vadd.f32 %v404, %v665
        %667 = vmatprep.mubr.f32.mxu0 0.0
        %668 = vmatmul.mubr.f32.gmra.mrb[0].mxu0 %v330
        %v669 = vpop.f32.mrb[0].mxu0
        %v670 = vadd.f32 %v400, %v669
        %v671 = vpop.f32.mrb[0].mxu0
        %v672 = vadd.f32 %v404, %v671
        %673 = vdwg.mxu0
        %674 = vmatprep.subr.mxu0 %v334
        %675 = vmatpush1.msra.mxu0 %v333
        %676 = vmatprep.subr.mxu0 %v338
        %677 = vmatpush1.msra.mxu0 %v337
        %678 = vmatprep.subr.mxu0 %v342
        %679 = vmatpush1.msra.mxu0 %v341
        %680 = vmatprep.subr.mxu0 %v346
        %681 = vmatpush1.msra.mxu0 %v345
        %682 = vmatprep.subr.mxu0 %v350
        %683 = vmatpush1.msra.mxu0 %v349
        %684 = vmatprep.subr.mxu0 %v354
        %685 = vmatpush1.msra.mxu0 %v353
        %686 = vmatprep.subr.mxu0 %v358
        %687 = vmatpush1.msra.mxu0 %v357
        %688 = vmatprep.subr.mxu0 %v362
        %689 = vmatpush1.msra.mxu0 %v361
        %690 = vmatprep.subr.mxu0 %v366
        %691 = vmatpush1.msra.mxu0 %v365
        %692 = vmatprep.subr.mxu0 %v370
        %693 = vmatpush1.msra.mxu0 %v369
        %694 = vmatprep.subr.mxu0 %v374
        %695 = vmatpush1.msra.mxu0 %v373
        %696 = vmatprep.subr.mxu0 %v378
        %697 = vmatpush1.msra.mxu0 %v377
        %698 = vmatprep.subr.mxu0 %v382
        %699 = vmatpush1.msra.mxu0 %v381
        %700 = vmatprep.subr.mxu0 %v386
        %701 = vmatpush1.msra.mxu0 %v385
        %702 = vmatprep.subr.mxu0 %v390
        %703 = vmatpush1.msra.mxu0 %v389
        %704 = vmatprep.subr.mxu0 %v394
        %705 = vmatpush1.msra.mxu0 %v393
        %706 = vmatprep.subr.mxu0 0.0
        %707 = vmatpush1.msra.mxu0 0.0
        %708 = vmatprep.subr.mxu0 0.0
        %709 = vmatpush1.msra.mxu0 0.0
        %710 = vmatprep.subr.mxu0 0.0
        %711 = vmatpush1.msra.mxu0 0.0
        %712 = vmatprep.subr.mxu0 0.0
        %713 = vmatpush1.msra.mxu0 0.0
        %714 = vmatprep.subr.mxu0 0.0
        %715 = vmatpush1.msra.mxu0 0.0
        %716 = vmatprep.subr.mxu0 0.0
        %717 = vmatpush1.msra.mxu0 0.0
        %718 = vmatprep.subr.mxu0 0.0
        %719 = vmatpush1.msra.mxu0 0.0
        %720 = vmatprep.subr.mxu0 0.0
        %721 = vmatpush1.msra.mxu0 0.0
        %722 = vmatprep.subr.mxu0 0.0
        %723 = vmatpush1.msra.mxu0 0.0
        %724 = vmatprep.subr.mxu0 0.0
        %725 = vmatpush1.msra.mxu0 0.0
        %726 = vmatprep.subr.mxu0 0.0
        %727 = vmatpush1.msra.mxu0 0.0
        %728 = vmatprep.subr.mxu0 0.0
        %729 = vmatpush1.msra.mxu0 0.0
        %730 = vmatprep.subr.mxu0 0.0
        %731 = vmatpush1.msra.mxu0 0.0
        %732 = vmatprep.subr.mxu0 0.0
        %733 = vmatpush1.msra.mxu0 0.0
        %734 = vmatprep.subr.mxu0 0.0
        %735 = vmatpush1.msra.mxu0 0.0
        %736 = vmatprep.subr.mxu0 0.0
        %737 = vmatpush1.msra.mxu0 0.0
        %738 = vmatprep.mubr.f32.mxu0 0.0
        %739 = vmatmul.mubr.f32.gmra.mrb[0].mxu0 %v299
        %v740 = vpop.f32.mrb[0].mxu0
        %v741 = vadd.f32 %v408, %v740
        %v742 = vpop.f32.mrb[0].mxu0
        %v743 = vadd.f32 %v412, %v742
        %744 = vmatprep.mubr.f32.mxu0 0.0
        %745 = vmatmul.mubr.f32.gmra.mrb[0].mxu0 %v300
        %v746 = vpop.f32.mrb[0].mxu0
        %v747 = vadd.f32 %v408, %v746
        %v748 = vpop.f32.mrb[0].mxu0
        %v749 = vadd.f32 %v412, %v748
        %750 = vmatprep.mubr.f32.mxu0 0.0
        %751 = vmatmul.mubr.f32.gmra.mrb[0].mxu0 %v301
        %v752 = vpop.f32.mrb[0].mxu0
        %v753 = vadd.f32 %v408, %v752
        %v754 = vpop.f32.mrb[0].mxu0
        %v755 = vadd.f32 %v412, %v754
        %756 = vmatprep.mubr.f32.mxu0 0.0
        %757 = vmatmul.mubr.f32.gmra.mrb[0].mxu0 %v302
        %v758 = vpop.f32.mrb[0].mxu0
        %v759 = vadd.f32 %v408, %v758
        %v760 = vpop.f32.mrb[0].mxu0
        %v761 = vadd.f32 %v412, %v760
        %762 = vmatprep.mubr.f32.mxu0 0.0
        %763 = vmatmul.mubr.f32.gmra.mrb[0].mxu0 %v303
        %v764 = vpop.f32.mrb[0].mxu0
        %v765 = vadd.f32 %v408, %v764
        %v766 = vpop.f32.mrb[0].mxu0
        %v767 = vadd.f32 %v412, %v766
        %768 = vmatprep.mubr.f32.mxu0 0.0
        %769 = vmatmul.mubr.f32.gmra.mrb[0].mxu0 %v304
        %v770 = vpop.f32.mrb[0].mxu0
        %v771 = vadd.f32 %v408, %v770
        %v772 = vpop.f32.mrb[0].mxu0
        %v773 = vadd.f32 %v412, %v772
        %774 = vmatprep.mubr.f32.mxu0 0.0
        %775 = vmatmul.mubr.f32.gmra.mrb[0].mxu0 %v305
        %v776 = vpop.f32.mrb[0].mxu0
        %v777 = vadd.f32 %v408, %v776
        %v778 = vpop.f32.mrb[0].mxu0
        %v779 = vadd.f32 %v412, %v778
        %780 = vmatprep.mubr.f32.mxu0 0.0
        %781 = vmatmul.mubr.f32.gmra.mrb[0].mxu0 %v306
        %v782 = vpop.f32.mrb[0].mxu0
        %v783 = vadd.f32 %v408, %v782
        %v784 = vpop.f32.mrb[0].mxu0
        %v785 = vadd.f32 %v412, %v784
        %786 = vmatprep.mubr.f32.mxu0 0.0
        %787 = vmatmul.mubr.f32.gmra.mrb[0].mxu0 %v307
        %v788 = vpop.f32.mrb[0].mxu0
        %v789 = vadd.f32 %v408, %v788
        %v790 = vpop.f32.mrb[0].mxu0
        %v791 = vadd.f32 %v412, %v790
        %792 = vmatprep.mubr.f32.mxu0 0.0
        %793 = vmatmul.mubr.f32.gmra.mrb[0].mxu0 %v308
        %v794 = vpop.f32.mrb[0].mxu0
        %v795 = vadd.f32 %v408, %v794
        %v796 = vpop.f32.mrb[0].mxu0
        %v797 = vadd.f32 %v412, %v796
        %798 = vmatprep.mubr.f32.mxu0 0.0
        %799 = vmatmul.mubr.f32.gmra.mrb[0].mxu0 %v309
        %v800 = vpop.f32.mrb[0].mxu0
        %v801 = vadd.f32 %v408, %v800
        %v802 = vpop.f32.mrb[0].mxu0
        %v803 = vadd.f32 %v412, %v802
        %804 = vmatprep.mubr.f32.mxu0 0.0
        %805 = vmatmul.mubr.f32.gmra.mrb[0].mxu0 %v310
        %v806 = vpop.f32.mrb[0].mxu0
        %v807 = vadd.f32 %v408, %v806
        %v808 = vpop.f32.mrb[0].mxu0
        %v809 = vadd.f32 %v412, %v808
        %810 = vmatprep.mubr.f32.mxu0 0.0
        %811 = vmatmul.mubr.f32.gmra.mrb[0].mxu0 %v311
        %v812 = vpop.f32.mrb[0].mxu0
        %v813 = vadd.f32 %v408, %v812
        %v814 = vpop.f32.mrb[0].mxu0
        %v815 = vadd.f32 %v412, %v814
        %816 = vmatprep.mubr.f32.mxu0 0.0
        %817 = vmatmul.mubr.f32.gmra.mrb[0].mxu0 %v312
        %v818 = vpop.f32.mrb[0].mxu0
        %v819 = vadd.f32 %v408, %v818
        %v820 = vpop.f32.mrb[0].mxu0
        %v821 = vadd.f32 %v412, %v820
        %822 = vmatprep.mubr.f32.mxu0 0.0
        %823 = vmatmul.mubr.f32.gmra.mrb[0].mxu0 %v313
        %v824 = vpop.f32.mrb[0].mxu0
        %v825 = vadd.f32 %v408, %v824
        %v826 = vpop.f32.mrb[0].mxu0
        %v827 = vadd.f32 %v412, %v826
        %828 = vmatprep.mubr.f32.mxu0 0.0
        %829 = vmatmul.mubr.f32.gmra.mrb[0].mxu0 %v314
        %v830 = vpop.f32.mrb[0].mxu0
        %v831 = vadd.f32 %v408, %v830
        %v832 = vpop.f32.mrb[0].mxu0
        %v833 = vadd.f32 %v412, %v832
        %834 = vmatprep.mubr.f32.mxu0 0.0
        %835 = vmatmul.mubr.f32.gmra.mrb[0].mxu0 %v315
        %v836 = vpop.f32.mrb[0].mxu0
        %v837 = vadd.f32 %v408, %v836
        %v838 = vpop.f32.mrb[0].mxu0
        %v839 = vadd.f32 %v412, %v838
        %840 = vmatprep.mubr.f32.mxu0 0.0
        %841 = vmatmul.mubr.f32.gmra.mrb[0].mxu0 %v316
        %v842 = vpop.f32.mrb[0].mxu0
        %v843 = vadd.f32 %v408, %v842
        %v844 = vpop.f32.mrb[0].mxu0
        %v845 = vadd.f32 %v412, %v844
        %846 = vmatprep.mubr.f32.mxu0 0.0
        %847 = vmatmul.mubr.f32.gmra.mrb[0].mxu0 %v317
        %v848 = vpop.f32.mrb[0].mxu0
        %v849 = vadd.f32 %v408, %v848
        %v850 = vpop.f32.mrb[0].mxu0
        %v851 = vadd.f32 %v412, %v850
        %852 = vmatprep.mubr.f32.mxu0 0.0
        %853 = vmatmul.mubr.f32.gmra.mrb[0].mxu0 %v318
        %v854 = vpop.f32.mrb[0].mxu0
        %v855 = vadd.f32 %v408, %v854
        %v856 = vpop.f32.mrb[0].mxu0
        %v857 = vadd.f32 %v412, %v856
        %858 = vmatprep.mubr.f32.mxu0 0.0
        %859 = vmatmul.mubr.f32.gmra.mrb[0].mxu0 %v319
        %v860 = vpop.f32.mrb[0].mxu0
        %v861 = vadd.f32 %v408, %v860
        %v862 = vpop.f32.mrb[0].mxu0
        %v863 = vadd.f32 %v412, %v862
        %864 = vmatprep.mubr.f32.mxu0 0.0
        %865 = vmatmul.mubr.f32.gmra.mrb[0].mxu0 %v320
        %v866 = vpop.f32.mrb[0].mxu0
        %v867 = vadd.f32 %v408, %v866
        %v868 = vpop.f32.mrb[0].mxu0
        %v869 = vadd.f32 %v412, %v868
        %870 = vmatprep.mubr.f32.mxu0 0.0
        %871 = vmatmul.mubr.f32.gmra.mrb[0].mxu0 %v321
        %v872 = vpop.f32.mrb[0].mxu0
        %v873 = vadd.f32 %v408, %v872
        %v874 = vpop.f32.mrb[0].mxu0
        %v875 = vadd.f32 %v412, %v874
        %876 = vmatprep.mubr.f32.mxu0 0.0
        %877 = vmatmul.mubr.f32.gmra.mrb[0].mxu0 %v322
        %v878 = vpop.f32.mrb[0].mxu0
        %v879 = vadd.f32 %v408, %v878
        %v880 = vpop.f32.mrb[0].mxu0
        %v881 = vadd.f32 %v412, %v880
        %882 = vmatprep.mubr.f32.mxu0 0.0
        %883 = vmatmul.mubr.f32.gmra.mrb[0].mxu0 %v323
        %v884 = vpop.f32.mrb[0].mxu0
        %v885 = vadd.f32 %v408, %v884
        %v886 = vpop.f32.mrb[0].mxu0
        %v887 = vadd.f32 %v412, %v886
        %888 = vmatprep.mubr.f32.mxu0 0.0
        %889 = vmatmul.mubr.f32.gmra.mrb[0].mxu0 %v324
        %v890 = vpop.f32.mrb[0].mxu0
        %v891 = vadd.f32 %v408, %v890
        %v892 = vpop.f32.mrb[0].mxu0
        %v893 = vadd.f32 %v412, %v892
        %894 = vmatprep.mubr.f32.mxu0 0.0
        %895 = vmatmul.mubr.f32.gmra.mrb[0].mxu0 %v325
        %v896 = vpop.f32.mrb[0].mxu0
        %v897 = vadd.f32 %v408, %v896
        %v898 = vpop.f32.mrb[0].mxu0
        %v899 = vadd.f32 %v412, %v898
        %900 = vmatprep.mubr.f32.mxu0 0.0
        %901 = vmatmul.mubr.f32.gmra.mrb[0].mxu0 %v326
        %v902 = vpop.f32.mrb[0].mxu0
        %v903 = vadd.f32 %v408, %v902
        %v904 = vpop.f32.mrb[0].mxu0
        %v905 = vadd.f32 %v412, %v904
        %906 = vmatprep.mubr.f32.mxu0 0.0
        %907 = vmatmul.mubr.f32.gmra.mrb[0].mxu0 %v327
        %v908 = vpop.f32.mrb[0].mxu0
        %v909 = vadd.f32 %v408, %v908
        %v910 = vpop.f32.mrb[0].mxu0
        %v911 = vadd.f32 %v412, %v910
        %912 = vmatprep.mubr.f32.mxu0 0.0
        %913 = vmatmul.mubr.f32.gmra.mrb[0].mxu0 %v328
        %v914 = vpop.f32.mrb[0].mxu0
        %v915 = vadd.f32 %v408, %v914
        %v916 = vpop.f32.mrb[0].mxu0
        %v917 = vadd.f32 %v412, %v916
        %918 = vmatprep.mubr.f32.mxu0 0.0
        %919 = vmatmul.mubr.f32.gmra.mrb[0].mxu0 %v329
        %v920 = vpop.f32.mrb[0].mxu0
        %v921 = vadd.f32 %v408, %v920
        %v922 = vpop.f32.mrb[0].mxu0
        %v923 = vadd.f32 %v412, %v922
        %924 = vmatprep.mubr.f32.mxu0 0.0
        %925 = vmatmul.mubr.f32.gmra.mrb[0].mxu0 %v330
        %v926 = vpop.f32.mrb[0].mxu0
        %v927 = vadd.f32 %v408, %v926
        %v928 = vpop.f32.mrb[0].mxu0
        %v929 = vadd.f32 %v412, %v928
        %930 = vdwg.mxu0
        %v931 = vmax.f32 %v484, 0.0
        %v932 = vmax.f32 %v486, 0.0
        %v933 = vmax.f32 %v741, 0.0
        %v934 = vmax.f32 %v743, 0.0
        %v935 = vmax.f32 %v490, 0.0
        %v936 = vmax.f32 %v492, 0.0
        %v937 = vmax.f32 %v747, 0.0
        %v938 = vmax.f32 %v749, 0.0
        %v939 = vmax.f32 %v496, 0.0
        %v940 = vmax.f32 %v498, 0.0
        %v941 = vmax.f32 %v753, 0.0
        %v942 = vmax.f32 %v755, 0.0
        %v943 = vmax.f32 %v502, 0.0
        %v944 = vmax.f32 %v504, 0.0
        %v945 = vmax.f32 %v759, 0.0
        %v946 = vmax.f32 %v761, 0.0
        %v947 = vmax.f32 %v508, 0.0
        %v948 = vmax.f32 %v510, 0.0
        %v949 = vmax.f32 %v765, 0.0
        %v950 = vmax.f32 %v767, 0.0
        %v951 = vmax.f32 %v514, 0.0
        %v952 = vmax.f32 %v516, 0.0
        %v953 = vmax.f32 %v771, 0.0
        %v954 = vmax.f32 %v773, 0.0
        %v955 = vmax.f32 %v520, 0.0
        %v956 = vmax.f32 %v522, 0.0
        %v957 = vmax.f32 %v777, 0.0
        %v958 = vmax.f32 %v779, 0.0
        %v959 = vmax.f32 %v526, 0.0
        %v960 = vmax.f32 %v528, 0.0
        %v961 = vmax.f32 %v783, 0.0
        %v962 = vmax.f32 %v785, 0.0
        %v963 = vmax.f32 %v532, 0.0
        %v964 = vmax.f32 %v534, 0.0
        %v965 = vmax.f32 %v789, 0.0
        %v966 = vmax.f32 %v791, 0.0
        %v967 = vmax.f32 %v538, 0.0
        %v968 = vmax.f32 %v540, 0.0
        %v969 = vmax.f32 %v795, 0.0
        %v970 = vmax.f32 %v797, 0.0
        %v971 = vmax.f32 %v544, 0.0
        %v972 = vmax.f32 %v546, 0.0
        %v973 = vmax.f32 %v801, 0.0
        %v974 = vmax.f32 %v803, 0.0
        %v975 = vmax.f32 %v550, 0.0
        %v976 = vmax.f32 %v552, 0.0
        %v977 = vmax.f32 %v807, 0.0
        %v978 = vmax.f32 %v809, 0.0
        %v979 = vmax.f32 %v556, 0.0
        %v980 = vmax.f32 %v558, 0.0
        %v981 = vmax.f32 %v813, 0.0
        %v982 = vmax.f32 %v815, 0.0
        %v983 = vmax.f32 %v562, 0.0
        %v984 = vmax.f32 %v564, 0.0
        %v985 = vmax.f32 %v819, 0.0
        %v986 = vmax.f32 %v821, 0.0
        %v987 = vmax.f32 %v568, 0.0
        %v988 = vmax.f32 %v570, 0.0
        %v989 = vmax.f32 %v825, 0.0
        %v990 = vmax.f32 %v827, 0.0
        %v991 = vmax.f32 %v574, 0.0
        %v992 = vmax.f32 %v576, 0.0
        %v993 = vmax.f32 %v831, 0.0
        %v994 = vmax.f32 %v833, 0.0
        %v995 = vmax.f32 %v580, 0.0
        %v996 = vmax.f32 %v582, 0.0
        %v997 = vmax.f32 %v837, 0.0
        %v998 = vmax.f32 %v839, 0.0
        %v999 = vmax.f32 %v586, 0.0
        %v1000 = vmax.f32 %v588, 0.0
        %v1001 = vmax.f32 %v843, 0.0
        %v1002 = vmax.f32 %v845, 0.0
        %v1003 = vmax.f32 %v592, 0.0
        %v1004 = vmax.f32 %v594, 0.0
        %v1005 = vmax.f32 %v849, 0.0
        %v1006 = vmax.f32 %v851, 0.0
        %v1007 = vmax.f32 %v598, 0.0
        %v1008 = vmax.f32 %v600, 0.0
        %v1009 = vmax.f32 %v855, 0.0
        %v1010 = vmax.f32 %v857, 0.0
        %v1011 = vmax.f32 %v604, 0.0
        %v1012 = vmax.f32 %v606, 0.0
        %v1013 = vmax.f32 %v861, 0.0
        %v1014 = vmax.f32 %v863, 0.0
        %v1015 = vmax.f32 %v610, 0.0
        %v1016 = vmax.f32 %v612, 0.0
        %v1017 = vmax.f32 %v867, 0.0
        %v1018 = vmax.f32 %v869, 0.0
        %v1019 = vmax.f32 %v616, 0.0
        %v1020 = vmax.f32 %v618, 0.0
        %v1021 = vmax.f32 %v873, 0.0
        %v1022 = vmax.f32 %v875, 0.0
        %v1023 = vmax.f32 %v622, 0.0
        %v1024 = vmax.f32 %v624, 0.0
        %v1025 = vmax.f32 %v879, 0.0
        %v1026 = vmax.f32 %v881, 0.0
        %v1027 = vmax.f32 %v628, 0.0
        %v1028 = vmax.f32 %v630, 0.0
        %v1029 = vmax.f32 %v885, 0.0
        %v1030 = vmax.f32 %v887, 0.0
        %v1031 = vmax.f32 %v634, 0.0
        %v1032 = vmax.f32 %v636, 0.0
        %v1033 = vmax.f32 %v891, 0.0
        %v1034 = vmax.f32 %v893, 0.0
        %v1035 = vmax.f32 %v640, 0.0
        %v1036 = vmax.f32 %v642, 0.0
        %v1037 = vmax.f32 %v897, 0.0
        %v1038 = vmax.f32 %v899, 0.0
        %v1039 = vmax.f32 %v646, 0.0
        %v1040 = vmax.f32 %v648, 0.0
        %v1041 = vmax.f32 %v903, 0.0
        %v1042 = vmax.f32 %v905, 0.0
        %v1043 = vmax.f32 %v652, 0.0
        %v1044 = vmax.f32 %v654, 0.0
        %v1045 = vmax.f32 %v909, 0.0
        %v1046 = vmax.f32 %v911, 0.0
        %v1047 = vmax.f32 %v658, 0.0
        %v1048 = vmax.f32 %v660, 0.0
        %v1049 = vmax.f32 %v915, 0.0
        %v1050 = vmax.f32 %v917, 0.0
        %v1051 = vmax.f32 %v664, 0.0
        %v1052 = vmax.f32 %v666, 0.0
        %v1053 = vmax.f32 %v921, 0.0
        %v1054 = vmax.f32 %v923, 0.0
        %v1055 = vmax.f32 %v670, 0.0
        %v1056 = vmax.f32 %v672, 0.0
        %v1057 = vmax.f32 %v927, 0.0
        %v1058 = vmax.f32 %v929, 0.0
        %v1059 = vld [vmem:[#allocation8] sm:$0xff]
        %v1060 = vld [vmem:[#allocation8 + $0x8] sm:$0xff]
        %v1061 = vld [vmem:[#allocation8 + $0x10] sm:$0xff]
        %v1062 = vld [vmem:[#allocation8 + $0x18] sm:$0xff]
        %v1063 = vld [vmem:[#allocation8 + $0x20] sm:$0xff]
        %v1064 = vld [vmem:[#allocation8 + $0x28] sm:$0xff]
        %v1065 = vld [vmem:[#allocation8 + $0x30] sm:$0xff]
        %v1066 = vld [vmem:[#allocation8 + $0x38] sm:$0xff]
        %v1067 = vld [vmem:[#allocation8 + $0x40] sm:$0xff]
        %v1068 = vld [vmem:[#allocation8 + $0x48] sm:$0xff]
        %v1069 = vld [vmem:[#allocation8 + $0x50] sm:$0xff]
        %v1070 = vld [vmem:[#allocation8 + $0x58] sm:$0xff]
        %v1071 = vld [vmem:[#allocation8 + $0x60] sm:$0xff]
        %v1072 = vld [vmem:[#allocation8 + $0x68] sm:$0xff]
        %v1073 = vld [vmem:[#allocation8 + $0x70] sm:$0xff]
        %v1074 = vld [vmem:[#allocation8 + $0x78] sm:$0xff]
        %v1075 = vld [vmem:[#allocation8 + $0x80] sm:$0xff]
        %v1076 = vld [vmem:[#allocation8 + $0x88] sm:$0xff]
        %v1077 = vld [vmem:[#allocation8 + $0x90] sm:$0xff]
        %v1078 = vld [vmem:[#allocation8 + $0x98] sm:$0xff]
        %v1079 = vld [vmem:[#allocation8 + $0xa0] sm:$0xff]
        %v1080 = vld [vmem:[#allocation8 + $0xa8] sm:$0xff]
        %v1081 = vld [vmem:[#allocation8 + $0xb0] sm:$0xff]
        %v1082 = vld [vmem:[#allocation8 + $0xb8] sm:$0xff]
        %v1083 = vld [vmem:[#allocation8 + $0xc0] sm:$0xff]
        %v1084 = vld [vmem:[#allocation8 + $0xc8] sm:$0xff]
        %v1085 = vld [vmem:[#allocation8 + $0xd0] sm:$0xff]
        %v1086 = vld [vmem:[#allocation8 + $0xd8] sm:$0xff]
        %v1087 = vld [vmem:[#allocation8 + $0xe0] sm:$0xff]
        %v1088 = vld [vmem:[#allocation8 + $0xe8] sm:$0xff]
        %v1089 = vld [vmem:[#allocation8 + $0xf0] sm:$0xff]
        %v1090 = vld [vmem:[#allocation8 + $0xf8] sm:$0xff]
        %v1091 = vld [vmem:[#allocation8 + $0x100] sm:$0xff]
        %v1092 = vld [vmem:[#allocation8 + $0x108] sm:$0xff]
        %v1093 = vld [vmem:[#allocation8 + $0x110] sm:$0xff]
        %v1094 = vld [vmem:[#allocation8 + $0x118] sm:$0xff]
        %v1095 = vld [vmem:[#allocation8 + $0x120] sm:$0xff]
        %v1096 = vld [vmem:[#allocation8 + $0x128] sm:$0xff]
        %v1097 = vld [vmem:[#allocation8 + $0x130] sm:$0xff]
        %v1098 = vld [vmem:[#allocation8 + $0x138] sm:$0xff]
        %v1099 = vld [vmem:[#allocation8 + $0x140] sm:$0xff]
        %v1100 = vld [vmem:[#allocation8 + $0x148] sm:$0xff]
        %v1101 = vld [vmem:[#allocation8 + $0x150] sm:$0xff]
        %v1102 = vld [vmem:[#allocation8 + $0x158] sm:$0xff]
        %v1103 = vld [vmem:[#allocation8 + $0x160] sm:$0xff]
        %v1104 = vld [vmem:[#allocation8 + $0x168] sm:$0xff]
        %v1105 = vld [vmem:[#allocation8 + $0x170] sm:$0xff]
        %v1106 = vld [vmem:[#allocation8 + $0x178] sm:$0xff]
        %v1107 = vld [vmem:[#allocation8 + $0x180] sm:$0xff]
        %v1108 = vld [vmem:[#allocation8 + $0x188] sm:$0xff]
        %v1109 = vld [vmem:[#allocation8 + $0x190] sm:$0xff]
        %v1110 = vld [vmem:[#allocation8 + $0x198] sm:$0xff]
        %v1111 = vld [vmem:[#allocation8 + $0x1a0] sm:$0xff]
        %v1112 = vld [vmem:[#allocation8 + $0x1a8] sm:$0xff]
        %v1113 = vld [vmem:[#allocation8 + $0x1b0] sm:$0xff]
        %v1114 = vld [vmem:[#allocation8 + $0x1b8] sm:$0xff]
        %v1115 = vld [vmem:[#allocation8 + $0x1c0] sm:$0xff]
        %v1116 = vld [vmem:[#allocation8 + $0x1c8] sm:$0xff]
        %v1117 = vld [vmem:[#allocation8 + $0x1d0] sm:$0xff]
        %v1118 = vld [vmem:[#allocation8 + $0x1d8] sm:$0xff]
        %v1119 = vld [vmem:[#allocation8 + $0x1e0] sm:$0xff]
        %v1120 = vld [vmem:[#allocation8 + $0x1e8] sm:$0xff]
        %v1121 = vld [vmem:[#allocation8 + $0x1f0] sm:$0xff]
        %v1122 = vld [vmem:[#allocation8 + $0x1f8] sm:$0xff]
        %v1123 = vld [vmem:[#allocation10] sm:$0x1]
        %v1125 = vlaneseq
        %v1126 = vshrl.u32 %v1125, 7
        %v1127 = vsub.s32 0, %v1126
        %v1128 = vrot.slane %v1123, %v1127
        %1130 = vmatprep.subr.mxu0 0.0
        %1131 = vmatpush1.msra.mxu0 %v1059
        %1132 = vmatprep.subr.mxu0 0.0
        %1133 = vmatpush1.msra.mxu0 %v1060
        %1134 = vmatprep.subr.mxu0 0.0
        %1135 = vmatpush1.msra.mxu0 %v1061
        %1136 = vmatprep.subr.mxu0 0.0
        %1137 = vmatpush1.msra.mxu0 %v1062
        %1138 = vmatprep.subr.mxu0 0.0
        %1139 = vmatpush1.msra.mxu0 %v1063
        %1140 = vmatprep.subr.mxu0 0.0
        %1141 = vmatpush1.msra.mxu0 %v1064
        %1142 = vmatprep.subr.mxu0 0.0
        %1143 = vmatpush1.msra.mxu0 %v1065
        %1144 = vmatprep.subr.mxu0 0.0
        %1145 = vmatpush1.msra.mxu0 %v1066
        %1146 = vmatprep.subr.mxu0 0.0
        %1147 = vmatpush1.msra.mxu0 %v1067
        %1148 = vmatprep.subr.mxu0 0.0
        %1149 = vmatpush1.msra.mxu0 %v1068
        %1150 = vmatprep.subr.mxu0 0.0
        %1151 = vmatpush1.msra.mxu0 %v1069
        %1152 = vmatprep.subr.mxu0 0.0
        %1153 = vmatpush1.msra.mxu0 %v1070
        %1154 = vmatprep.subr.mxu0 0.0
        %1155 = vmatpush1.msra.mxu0 %v1071
        %1156 = vmatprep.subr.mxu0 0.0
        %1157 = vmatpush1.msra.mxu0 %v1072
        %1158 = vmatprep.subr.mxu0 0.0
        %1159 = vmatpush1.msra.mxu0 %v1073
        %1160 = vmatprep.subr.mxu0 0.0
        %1161 = vmatpush1.msra.mxu0 %v1074
        %1162 = vmatprep.subr.mxu0 0.0
        %1163 = vmatpush1.msra.mxu0 %v1075
        %1164 = vmatprep.subr.mxu0 0.0
        %1165 = vmatpush1.msra.mxu0 %v1076
        %1166 = vmatprep.subr.mxu0 0.0
        %1167 = vmatpush1.msra.mxu0 %v1077
        %1168 = vmatprep.subr.mxu0 0.0
        %1169 = vmatpush1.msra.mxu0 %v1078
        %1170 = vmatprep.subr.mxu0 0.0
        %1171 = vmatpush1.msra.mxu0 %v1079
        %1172 = vmatprep.subr.mxu0 0.0
        %1173 = vmatpush1.msra.mxu0 %v1080
        %1174 = vmatprep.subr.mxu0 0.0
        %1175 = vmatpush1.msra.mxu0 %v1081
        %1176 = vmatprep.subr.mxu0 0.0
        %1177 = vmatpush1.msra.mxu0 %v1082
        %1178 = vmatprep.subr.mxu0 0.0
        %1179 = vmatpush1.msra.mxu0 %v1083
        %1180 = vmatprep.subr.mxu0 0.0
        %1181 = vmatpush1.msra.mxu0 %v1084
        %1182 = vmatprep.subr.mxu0 0.0
        %1183 = vmatpush1.msra.mxu0 %v1085
        %1184 = vmatprep.subr.mxu0 0.0
        %1185 = vmatpush1.msra.mxu0 %v1086
        %1186 = vmatprep.subr.mxu0 0.0
        %1187 = vmatpush1.msra.mxu0 %v1087
        %1188 = vmatprep.subr.mxu0 0.0
        %1189 = vmatpush1.msra.mxu0 %v1088
        %1190 = vmatprep.subr.mxu0 0.0
        %1191 = vmatpush1.msra.mxu0 %v1089
        %1192 = vmatprep.subr.mxu0 0.0
        %1193 = vmatpush1.msra.mxu0 %v1090
        %1194 = vmatprep.mubr.f32.mxu0 %v932
        %1195 = vmatmul.mubr.f32.gmra.mrb[0].mxu0 %v931
        %v1196 = vpop.f32.mrb[0].mxu0
        %v1197 = vadd.f32 %v1128, %v1196
        %v1198 = vpop.f32.mrb[0].mxu0
        %1199 = vmatprep.mubr.f32.mxu0 %v936
        %1200 = vmatmul.mubr.f32.gmra.mrb[0].mxu0 %v935
        %v1201 = vpop.f32.mrb[0].mxu0
        %v1202 = vadd.f32 %v1128, %v1201
        %v1203 = vpop.f32.mrb[0].mxu0
        %1204 = vmatprep.mubr.f32.mxu0 %v940
        %1205 = vmatmul.mubr.f32.gmra.mrb[0].mxu0 %v939
        %v1206 = vpop.f32.mrb[0].mxu0
        %v1207 = vadd.f32 %v1128, %v1206
        %v1208 = vpop.f32.mrb[0].mxu0
        %1209 = vmatprep.mubr.f32.mxu0 %v944
        %1210 = vmatmul.mubr.f32.gmra.mrb[0].mxu0 %v943
        %v1211 = vpop.f32.mrb[0].mxu0
        %v1212 = vadd.f32 %v1128, %v1211
        %v1213 = vpop.f32.mrb[0].mxu0
        %1214 = vmatprep.mubr.f32.mxu0 %v948
        %1215 = vmatmul.mubr.f32.gmra.mrb[0].mxu0 %v947
        %v1216 = vpop.f32.mrb[0].mxu0
        %v1217 = vadd.f32 %v1128, %v1216
        %v1218 = vpop.f32.mrb[0].mxu0
        %1219 = vmatprep.mubr.f32.mxu0 %v952
        %1220 = vmatmul.mubr.f32.gmra.mrb[0].mxu0 %v951
        %v1221 = vpop.f32.mrb[0].mxu0
        %v1222 = vadd.f32 %v1128, %v1221
        %v1223 = vpop.f32.mrb[0].mxu0
        %1224 = vmatprep.mubr.f32.mxu0 %v956
        %1225 = vmatmul.mubr.f32.gmra.mrb[0].mxu0 %v955
        %v1226 = vpop.f32.mrb[0].mxu0
        %v1227 = vadd.f32 %v1128, %v1226
        %v1228 = vpop.f32.mrb[0].mxu0
        %1229 = vmatprep.mubr.f32.mxu0 %v960
        %1230 = vmatmul.mubr.f32.gmra.mrb[0].mxu0 %v959
        %v1231 = vpop.f32.mrb[0].mxu0
        %v1232 = vadd.f32 %v1128, %v1231
        %v1233 = vpop.f32.mrb[0].mxu0
        %1234 = vmatprep.mubr.f32.mxu0 %v964
        %1235 = vmatmul.mubr.f32.gmra.mrb[0].mxu0 %v963
        %v1236 = vpop.f32.mrb[0].mxu0
        %v1237 = vadd.f32 %v1128, %v1236
        %v1238 = vpop.f32.mrb[0].mxu0
        %1239 = vmatprep.mubr.f32.mxu0 %v968
        %1240 = vmatmul.mubr.f32.gmra.mrb[0].mxu0 %v967
        %v1241 = vpop.f32.mrb[0].mxu0
        %v1242 = vadd.f32 %v1128, %v1241
        %v1243 = vpop.f32.mrb[0].mxu0
        %1244 = vmatprep.mubr.f32.mxu0 %v972
        %1245 = vmatmul.mubr.f32.gmra.mrb[0].mxu0 %v971
        %v1246 = vpop.f32.mrb[0].mxu0
        %v1247 = vadd.f32 %v1128, %v1246
        %v1248 = vpop.f32.mrb[0].mxu0
        %1249 = vmatprep.mubr.f32.mxu0 %v976
        %1250 = vmatmul.mubr.f32.gmra.mrb[0].mxu0 %v975
        %v1251 = vpop.f32.mrb[0].mxu0
        %v1252 = vadd.f32 %v1128, %v1251
        %v1253 = vpop.f32.mrb[0].mxu0
        %1254 = vmatprep.mubr.f32.mxu0 %v980
        %1255 = vmatmul.mubr.f32.gmra.mrb[0].mxu0 %v979
        %v1256 = vpop.f32.mrb[0].mxu0
        %v1257 = vadd.f32 %v1128, %v1256
        %v1258 = vpop.f32.mrb[0].mxu0
        %1259 = vmatprep.mubr.f32.mxu0 %v984
        %1260 = vmatmul.mubr.f32.gmra.mrb[0].mxu0 %v983
        %v1261 = vpop.f32.mrb[0].mxu0
        %v1262 = vadd.f32 %v1128, %v1261
        %v1263 = vpop.f32.mrb[0].mxu0
        %1264 = vmatprep.mubr.f32.mxu0 %v988
        %1265 = vmatmul.mubr.f32.gmra.mrb[0].mxu0 %v987
        %v1266 = vpop.f32.mrb[0].mxu0
        %v1267 = vadd.f32 %v1128, %v1266
        %v1268 = vpop.f32.mrb[0].mxu0
        %1269 = vmatprep.mubr.f32.mxu0 %v992
        %1270 = vmatmul.mubr.f32.gmra.mrb[0].mxu0 %v991
        %v1271 = vpop.f32.mrb[0].mxu0
        %v1272 = vadd.f32 %v1128, %v1271
        %v1273 = vpop.f32.mrb[0].mxu0
        %1274 = vmatprep.mubr.f32.mxu0 %v996
        %1275 = vmatmul.mubr.f32.gmra.mrb[0].mxu0 %v995
        %v1276 = vpop.f32.mrb[0].mxu0
        %v1277 = vadd.f32 %v1128, %v1276
        %v1278 = vpop.f32.mrb[0].mxu0
        %1279 = vmatprep.mubr.f32.mxu0 %v1000
        %1280 = vmatmul.mubr.f32.gmra.mrb[0].mxu0 %v999
        %v1281 = vpop.f32.mrb[0].mxu0
        %v1282 = vadd.f32 %v1128, %v1281
        %v1283 = vpop.f32.mrb[0].mxu0
        %1284 = vmatprep.mubr.f32.mxu0 %v1004
        %1285 = vmatmul.mubr.f32.gmra.mrb[0].mxu0 %v1003
        %v1286 = vpop.f32.mrb[0].mxu0
        %v1287 = vadd.f32 %v1128, %v1286
        %v1288 = vpop.f32.mrb[0].mxu0
        %1289 = vmatprep.mubr.f32.mxu0 %v1008
        %1290 = vmatmul.mubr.f32.gmra.mrb[0].mxu0 %v1007
        %v1291 = vpop.f32.mrb[0].mxu0
        %v1292 = vadd.f32 %v1128, %v1291
        %v1293 = vpop.f32.mrb[0].mxu0
        %1294 = vmatprep.mubr.f32.mxu0 %v1012
        %1295 = vmatmul.mubr.f32.gmra.mrb[0].mxu0 %v1011
        %v1296 = vpop.f32.mrb[0].mxu0
        %v1297 = vadd.f32 %v1128, %v1296
        %v1298 = vpop.f32.mrb[0].mxu0
        %1299 = vmatprep.mubr.f32.mxu0 %v1016
        %1300 = vmatmul.mubr.f32.gmra.mrb[0].mxu0 %v1015
        %v1301 = vpop.f32.mrb[0].mxu0
        %v1302 = vadd.f32 %v1128, %v1301
        %v1303 = vpop.f32.mrb[0].mxu0
        %1304 = vmatprep.mubr.f32.mxu0 %v1020
        %1305 = vmatmul.mubr.f32.gmra.mrb[0].mxu0 %v1019
        %v1306 = vpop.f32.mrb[0].mxu0
        %v1307 = vadd.f32 %v1128, %v1306
        %v1308 = vpop.f32.mrb[0].mxu0
        %1309 = vmatprep.mubr.f32.mxu0 %v1024
        %1310 = vmatmul.mubr.f32.gmra.mrb[0].mxu0 %v1023
        %v1311 = vpop.f32.mrb[0].mxu0
        %v1312 = vadd.f32 %v1128, %v1311
        %v1313 = vpop.f32.mrb[0].mxu0
        %1314 = vmatprep.mubr.f32.mxu0 %v1028
        %1315 = vmatmul.mubr.f32.gmra.mrb[0].mxu0 %v1027
        %v1316 = vpop.f32.mrb[0].mxu0
        %v1317 = vadd.f32 %v1128, %v1316
        %v1318 = vpop.f32.mrb[0].mxu0
        %1319 = vmatprep.mubr.f32.mxu0 %v1032
        %1320 = vmatmul.mubr.f32.gmra.mrb[0].mxu0 %v1031
        %v1321 = vpop.f32.mrb[0].mxu0
        %v1322 = vadd.f32 %v1128, %v1321
        %v1323 = vpop.f32.mrb[0].mxu0
        %1324 = vmatprep.mubr.f32.mxu0 %v1036
        %1325 = vmatmul.mubr.f32.gmra.mrb[0].mxu0 %v1035
        %v1326 = vpop.f32.mrb[0].mxu0
        %v1327 = vadd.f32 %v1128, %v1326
        %v1328 = vpop.f32.mrb[0].mxu0
        %1329 = vmatprep.mubr.f32.mxu0 %v1040
        %1330 = vmatmul.mubr.f32.gmra.mrb[0].mxu0 %v1039
        %v1331 = vpop.f32.mrb[0].mxu0
        %v1332 = vadd.f32 %v1128, %v1331
        %v1333 = vpop.f32.mrb[0].mxu0
        %1334 = vmatprep.mubr.f32.mxu0 %v1044
        %1335 = vmatmul.mubr.f32.gmra.mrb[0].mxu0 %v1043
        %v1336 = vpop.f32.mrb[0].mxu0
        %v1337 = vadd.f32 %v1128, %v1336
        %v1338 = vpop.f32.mrb[0].mxu0
        %1339 = vmatprep.mubr.f32.mxu0 %v1048
        %1340 = vmatmul.mubr.f32.gmra.mrb[0].mxu0 %v1047
        %v1341 = vpop.f32.mrb[0].mxu0
        %v1342 = vadd.f32 %v1128, %v1341
        %v1343 = vpop.f32.mrb[0].mxu0
        %1344 = vmatprep.mubr.f32.mxu0 %v1052
        %1345 = vmatmul.mubr.f32.gmra.mrb[0].mxu0 %v1051
        %v1346 = vpop.f32.mrb[0].mxu0
        %v1347 = vadd.f32 %v1128, %v1346
        %v1348 = vpop.f32.mrb[0].mxu0
        %1349 = vmatprep.mubr.f32.mxu0 %v1056
        %1350 = vmatmul.mubr.f32.gmra.mrb[0].mxu0 %v1055
        %v1351 = vpop.f32.mrb[0].mxu0
        %v1352 = vadd.f32 %v1128, %v1351
        %v1353 = vpop.f32.mrb[0].mxu0
        %1354 = vdwg.mxu0
        %1355 = vmatprep.subr.mxu0 0.0
        %1356 = vmatpush1.msra.mxu0 %v1091
        %1357 = vmatprep.subr.mxu0 0.0
        %1358 = vmatpush1.msra.mxu0 %v1092
        %1359 = vmatprep.subr.mxu0 0.0
        %1360 = vmatpush1.msra.mxu0 %v1093
        %1361 = vmatprep.subr.mxu0 0.0
        %1362 = vmatpush1.msra.mxu0 %v1094
        %1363 = vmatprep.subr.mxu0 0.0
        %1364 = vmatpush1.msra.mxu0 %v1095
        %1365 = vmatprep.subr.mxu0 0.0
        %1366 = vmatpush1.msra.mxu0 %v1096
        %1367 = vmatprep.subr.mxu0 0.0
        %1368 = vmatpush1.msra.mxu0 %v1097
        %1369 = vmatprep.subr.mxu0 0.0
        %1370 = vmatpush1.msra.mxu0 %v1098
        %1371 = vmatprep.subr.mxu0 0.0
        %1372 = vmatpush1.msra.mxu0 %v1099
        %1373 = vmatprep.subr.mxu0 0.0
        %1374 = vmatpush1.msra.mxu0 %v1100
        %1375 = vmatprep.subr.mxu0 0.0
        %1376 = vmatpush1.msra.mxu0 %v1101
        %1377 = vmatprep.subr.mxu0 0.0
        %1378 = vmatpush1.msra.mxu0 %v1102
        %1379 = vmatprep.subr.mxu0 0.0
        %1380 = vmatpush1.msra.mxu0 %v1103
        %1381 = vmatprep.subr.mxu0 0.0
        %1382 = vmatpush1.msra.mxu0 %v1104
        %1383 = vmatprep.subr.mxu0 0.0
        %1384 = vmatpush1.msra.mxu0 %v1105
        %1385 = vmatprep.subr.mxu0 0.0
        %1386 = vmatpush1.msra.mxu0 %v1106
        %1387 = vmatprep.subr.mxu0 0.0
        %1388 = vmatpush1.msra.mxu0 %v1107
        %1389 = vmatprep.subr.mxu0 0.0
        %1390 = vmatpush1.msra.mxu0 %v1108
        %1391 = vmatprep.subr.mxu0 0.0
        %1392 = vmatpush1.msra.mxu0 %v1109
        %1393 = vmatprep.subr.mxu0 0.0
        %1394 = vmatpush1.msra.mxu0 %v1110
        %1395 = vmatprep.subr.mxu0 0.0
        %1396 = vmatpush1.msra.mxu0 %v1111
        %1397 = vmatprep.subr.mxu0 0.0
        %1398 = vmatpush1.msra.mxu0 %v1112
        %1399 = vmatprep.subr.mxu0 0.0
        %1400 = vmatpush1.msra.mxu0 %v1113
        %1401 = vmatprep.subr.mxu0 0.0
        %1402 = vmatpush1.msra.mxu0 %v1114
        %1403 = vmatprep.subr.mxu0 0.0
        %1404 = vmatpush1.msra.mxu0 %v1115
        %1405 = vmatprep.subr.mxu0 0.0
        %1406 = vmatpush1.msra.mxu0 %v1116
        %1407 = vmatprep.subr.mxu0 0.0
        %1408 = vmatpush1.msra.mxu0 %v1117
        %1409 = vmatprep.subr.mxu0 0.0
        %1410 = vmatpush1.msra.mxu0 %v1118
        %1411 = vmatprep.subr.mxu0 0.0
        %1412 = vmatpush1.msra.mxu0 %v1119
        %1413 = vmatprep.subr.mxu0 0.0
        %1414 = vmatpush1.msra.mxu0 %v1120
        %1415 = vmatprep.subr.mxu0 0.0
        %1416 = vmatpush1.msra.mxu0 %v1121
        %1417 = vmatprep.subr.mxu0 0.0
        %1418 = vmatpush1.msra.mxu0 %v1122
        %1419 = vmatprep.mubr.f32.mxu0 %v934
        %1420 = vmatmul.mubr.f32.gmra.mrb[0].mxu0 %v933
        %v1421 = vpop.f32.mrb[0].mxu0
        %v1422 = vadd.f32 %v1197, %v1421
        %v1423 = vpop.f32.mrb[0].mxu0
        %1424 = vmatprep.mubr.f32.mxu0 %v938
        %1425 = vmatmul.mubr.f32.gmra.mrb[0].mxu0 %v937
        %v1426 = vpop.f32.mrb[0].mxu0
        %v1427 = vadd.f32 %v1202, %v1426
        %v1428 = vpop.f32.mrb[0].mxu0
        %1429 = vmatprep.mubr.f32.mxu0 %v942
        %1430 = vmatmul.mubr.f32.gmra.mrb[0].mxu0 %v941
        %v1431 = vpop.f32.mrb[0].mxu0
        %v1432 = vadd.f32 %v1207, %v1431
        %v1433 = vpop.f32.mrb[0].mxu0
        %1434 = vmatprep.mubr.f32.mxu0 %v946
        %1435 = vmatmul.mubr.f32.gmra.mrb[0].mxu0 %v945
        %v1436 = vpop.f32.mrb[0].mxu0
        %v1437 = vadd.f32 %v1212, %v1436
        %v1438 = vpop.f32.mrb[0].mxu0
        %1439 = vmatprep.mubr.f32.mxu0 %v950
        %1440 = vmatmul.mubr.f32.gmra.mrb[0].mxu0 %v949
        %v1441 = vpop.f32.mrb[0].mxu0
        %v1442 = vadd.f32 %v1217, %v1441
        %v1443 = vpop.f32.mrb[0].mxu0
        %1444 = vmatprep.mubr.f32.mxu0 %v954
        %1445 = vmatmul.mubr.f32.gmra.mrb[0].mxu0 %v953
        %v1446 = vpop.f32.mrb[0].mxu0
        %v1447 = vadd.f32 %v1222, %v1446
        %v1448 = vpop.f32.mrb[0].mxu0
        %1449 = vmatprep.mubr.f32.mxu0 %v958
        %1450 = vmatmul.mubr.f32.gmra.mrb[0].mxu0 %v957
        %v1451 = vpop.f32.mrb[0].mxu0
        %v1452 = vadd.f32 %v1227, %v1451
        %v1453 = vpop.f32.mrb[0].mxu0
        %1454 = vmatprep.mubr.f32.mxu0 %v962
        %1455 = vmatmul.mubr.f32.gmra.mrb[0].mxu0 %v961
        %v1456 = vpop.f32.mrb[0].mxu0
        %v1457 = vadd.f32 %v1232, %v1456
        %v1458 = vpop.f32.mrb[0].mxu0
        %1459 = vmatprep.mubr.f32.mxu0 %v966
        %1460 = vmatmul.mubr.f32.gmra.mrb[0].mxu0 %v965
        %v1461 = vpop.f32.mrb[0].mxu0
        %v1462 = vadd.f32 %v1237, %v1461
        %v1463 = vpop.f32.mrb[0].mxu0
        %1464 = vmatprep.mubr.f32.mxu0 %v970
        %1465 = vmatmul.mubr.f32.gmra.mrb[0].mxu0 %v969
        %v1466 = vpop.f32.mrb[0].mxu0
        %v1467 = vadd.f32 %v1242, %v1466
        %v1468 = vpop.f32.mrb[0].mxu0
        %1469 = vmatprep.mubr.f32.mxu0 %v974
        %1470 = vmatmul.mubr.f32.gmra.mrb[0].mxu0 %v973
        %v1471 = vpop.f32.mrb[0].mxu0
        %v1472 = vadd.f32 %v1247, %v1471
        %v1473 = vpop.f32.mrb[0].mxu0
        %1474 = vmatprep.mubr.f32.mxu0 %v978
        %1475 = vmatmul.mubr.f32.gmra.mrb[0].mxu0 %v977
        %v1476 = vpop.f32.mrb[0].mxu0
        %v1477 = vadd.f32 %v1252, %v1476
        %v1478 = vpop.f32.mrb[0].mxu0
        %1479 = vmatprep.mubr.f32.mxu0 %v982
        %1480 = vmatmul.mubr.f32.gmra.mrb[0].mxu0 %v981
        %v1481 = vpop.f32.mrb[0].mxu0
        %v1482 = vadd.f32 %v1257, %v1481
        %v1483 = vpop.f32.mrb[0].mxu0
        %1484 = vmatprep.mubr.f32.mxu0 %v986
        %1485 = vmatmul.mubr.f32.gmra.mrb[0].mxu0 %v985
        %v1486 = vpop.f32.mrb[0].mxu0
        %v1487 = vadd.f32 %v1262, %v1486
        %v1488 = vpop.f32.mrb[0].mxu0
        %1489 = vmatprep.mubr.f32.mxu0 %v990
        %1490 = vmatmul.mubr.f32.gmra.mrb[0].mxu0 %v989
        %v1491 = vpop.f32.mrb[0].mxu0
        %v1492 = vadd.f32 %v1267, %v1491
        %v1493 = vpop.f32.mrb[0].mxu0
        %1494 = vmatprep.mubr.f32.mxu0 %v994
        %1495 = vmatmul.mubr.f32.gmra.mrb[0].mxu0 %v993
        %v1496 = vpop.f32.mrb[0].mxu0
        %v1497 = vadd.f32 %v1272, %v1496
        %v1498 = vpop.f32.mrb[0].mxu0
        %1499 = vmatprep.mubr.f32.mxu0 %v998
        %1500 = vmatmul.mubr.f32.gmra.mrb[0].mxu0 %v997
        %v1501 = vpop.f32.mrb[0].mxu0
        %v1502 = vadd.f32 %v1277, %v1501
        %v1503 = vpop.f32.mrb[0].mxu0
        %1504 = vmatprep.mubr.f32.mxu0 %v1002
        %1505 = vmatmul.mubr.f32.gmra.mrb[0].mxu0 %v1001
        %v1506 = vpop.f32.mrb[0].mxu0
        %v1507 = vadd.f32 %v1282, %v1506
        %v1508 = vpop.f32.mrb[0].mxu0
        %1509 = vmatprep.mubr.f32.mxu0 %v1006
        %1510 = vmatmul.mubr.f32.gmra.mrb[0].mxu0 %v1005
        %v1511 = vpop.f32.mrb[0].mxu0
        %v1512 = vadd.f32 %v1287, %v1511
        %v1513 = vpop.f32.mrb[0].mxu0
        %1514 = vmatprep.mubr.f32.mxu0 %v1010
        %1515 = vmatmul.mubr.f32.gmra.mrb[0].mxu0 %v1009
        %v1516 = vpop.f32.mrb[0].mxu0
        %v1517 = vadd.f32 %v1292, %v1516
        %v1518 = vpop.f32.mrb[0].mxu0
        %1519 = vmatprep.mubr.f32.mxu0 %v1014
        %1520 = vmatmul.mubr.f32.gmra.mrb[0].mxu0 %v1013
        %v1521 = vpop.f32.mrb[0].mxu0
        %v1522 = vadd.f32 %v1297, %v1521
        %v1523 = vpop.f32.mrb[0].mxu0
        %1524 = vmatprep.mubr.f32.mxu0 %v1018
        %1525 = vmatmul.mubr.f32.gmra.mrb[0].mxu0 %v1017
        %v1526 = vpop.f32.mrb[0].mxu0
        %v1527 = vadd.f32 %v1302, %v1526
        %v1528 = vpop.f32.mrb[0].mxu0
        %1529 = vmatprep.mubr.f32.mxu0 %v1022
        %1530 = vmatmul.mubr.f32.gmra.mrb[0].mxu0 %v1021
        %v1531 = vpop.f32.mrb[0].mxu0
        %v1532 = vadd.f32 %v1307, %v1531
        %v1533 = vpop.f32.mrb[0].mxu0
        %1534 = vmatprep.mubr.f32.mxu0 %v1026
        %1535 = vmatmul.mubr.f32.gmra.mrb[0].mxu0 %v1025
        %v1536 = vpop.f32.mrb[0].mxu0
        %v1537 = vadd.f32 %v1312, %v1536
        %v1538 = vpop.f32.mrb[0].mxu0
        %1539 = vmatprep.mubr.f32.mxu0 %v1030
        %1540 = vmatmul.mubr.f32.gmra.mrb[0].mxu0 %v1029
        %v1541 = vpop.f32.mrb[0].mxu0
        %v1542 = vadd.f32 %v1317, %v1541
        %v1543 = vpop.f32.mrb[0].mxu0
        %1544 = vmatprep.mubr.f32.mxu0 %v1034
        %1545 = vmatmul.mubr.f32.gmra.mrb[0].mxu0 %v1033
        %v1546 = vpop.f32.mrb[0].mxu0
        %v1547 = vadd.f32 %v1322, %v1546
        %v1548 = vpop.f32.mrb[0].mxu0
        %1549 = vmatprep.mubr.f32.mxu0 %v1038
        %1550 = vmatmul.mubr.f32.gmra.mrb[0].mxu0 %v1037
        %v1551 = vpop.f32.mrb[0].mxu0
        %v1552 = vadd.f32 %v1327, %v1551
        %v1553 = vpop.f32.mrb[0].mxu0
        %1554 = vmatprep.mubr.f32.mxu0 %v1042
        %1555 = vmatmul.mubr.f32.gmra.mrb[0].mxu0 %v1041
        %v1556 = vpop.f32.mrb[0].mxu0
        %v1557 = vadd.f32 %v1332, %v1556
        %v1558 = vpop.f32.mrb[0].mxu0
        %1559 = vmatprep.mubr.f32.mxu0 %v1046
        %1560 = vmatmul.mubr.f32.gmra.mrb[0].mxu0 %v1045
        %v1561 = vpop.f32.mrb[0].mxu0
        %v1562 = vadd.f32 %v1337, %v1561
        %v1563 = vpop.f32.mrb[0].mxu0
        %1564 = vmatprep.mubr.f32.mxu0 %v1050
        %1565 = vmatmul.mubr.f32.gmra.mrb[0].mxu0 %v1049
        %v1566 = vpop.f32.mrb[0].mxu0
        %v1567 = vadd.f32 %v1342, %v1566
        %v1568 = vpop.f32.mrb[0].mxu0
        %1569 = vmatprep.mubr.f32.mxu0 %v1054
        %1570 = vmatmul.mubr.f32.gmra.mrb[0].mxu0 %v1053
        %v1571 = vpop.f32.mrb[0].mxu0
        %v1572 = vadd.f32 %v1347, %v1571
        %v1573 = vpop.f32.mrb[0].mxu0
        %1574 = vmatprep.mubr.f32.mxu0 %v1058
        %1575 = vmatmul.mubr.f32.gmra.mrb[0].mxu0 %v1057
        %v1576 = vpop.f32.mrb[0].mxu0
        %v1577 = vadd.f32 %v1352, %v1576
        %v1578 = vpop.f32.mrb[0].mxu0
        %1579 = vdwg.mxu0
        %1580 = vst [vmem:[%s296] sm:$0xff] %v1422
        %1581 = vst [vmem:[%s296 + $0x8] sm:$0xff] %v1427
        %1582 = vst [vmem:[%s296 + $0x10] sm:$0xff] %v1432
        %1583 = vst [vmem:[%s296 + $0x18] sm:$0xff] %v1437
        %1584 = vst [vmem:[%s296 + $0x20] sm:$0xff] %v1442
        %1585 = vst [vmem:[%s296 + $0x28] sm:$0xff] %v1447
        %1586 = vst [vmem:[%s296 + $0x30] sm:$0xff] %v1452
        %1587 = vst [vmem:[%s296 + $0x38] sm:$0xff] %v1457
        %1588 = vst [vmem:[%s296 + $0x40] sm:$0xff] %v1462
        %1589 = vst [vmem:[%s296 + $0x48] sm:$0xff] %v1467
        %1590 = vst [vmem:[%s296 + $0x50] sm:$0xff] %v1472
        %1591 = vst [vmem:[%s296 + $0x58] sm:$0xff] %v1477
        %1592 = vst [vmem:[%s296 + $0x60] sm:$0xff] %v1482
        %1593 = vst [vmem:[%s296 + $0x68] sm:$0xff] %v1487
        %1594 = vst [vmem:[%s296 + $0x70] sm:$0xff] %v1492
        %1595 = vst [vmem:[%s296 + $0x78] sm:$0xff] %v1497
        %1596 = vst [vmem:[%s296 + $0x80] sm:$0xff] %v1502
        %1597 = vst [vmem:[%s296 + $0x88] sm:$0xff] %v1507
        %1598 = vst [vmem:[%s296 + $0x90] sm:$0xff] %v1512
        %1599 = vst [vmem:[%s296 + $0x98] sm:$0xff] %v1517
        %1600 = vst [vmem:[%s296 + $0xa0] sm:$0xff] %v1522
        %1601 = vst [vmem:[%s296 + $0xa8] sm:$0xff] %v1527
        %1602 = vst [vmem:[%s296 + $0xb0] sm:$0xff] %v1532
        %1603 = vst [vmem:[%s296 + $0xb8] sm:$0xff] %v1537
        %1604 = vst [vmem:[%s296 + $0xc0] sm:$0xff] %v1542
        %1605 = vst [vmem:[%s296 + $0xc8] sm:$0xff] %v1547
        %1606 = vst [vmem:[%s296 + $0xd0] sm:$0xff] %v1552
        %1607 = vst [vmem:[%s296 + $0xd8] sm:$0xff] %v1557
        %1608 = vst [vmem:[%s296 + $0xe0] sm:$0xff] %v1562
        %1609 = vst [vmem:[%s296 + $0xe8] sm:$0xff] %v1567
        %1610 = vst [vmem:[%s296 + $0xf0] sm:$0xff] %v1572
        %1611 = vst [vmem:[%s296 + $0xf8] sm:$0xff] %v1577
        %s1612 = sand.u32 %s142, 1
        %s1613 = scalar_lea.sflag [#allocation4], %s1612
        %s1614 = sand.u32 %s142, 1
        %s1615 = smul.addr %s1614, 256
        %s1616 = scalar_lea.vmem [#allocation11], %s1615
        // Predicated region
        $region61: #{tpu_custom_call.1} parent=39 // pred_check
          %p1617 = pneg %p152
        $region62: #{tpu_custom_call.1} parent=39 // pred_check_branch
          %1619 = sbr.rel (%p1617) target = $region64
        $region63: #{tpu_custom_call.1} parent=39 // pred_region
          %s1620 = smul.u32 32, %s24
          %s1622 = ssub.s32 4096, 4096
          %1623 = vsyncadd %s1613, %s1622
          %s1624 = smul.addr %s1620, 128
          %s1625 = scalar_lea.hbm %s5, %s1624
          %s1626 = sshll.u32 %s1616, 4
          %s1627 = int_to_ptr.vmem [resolvable:$true] %s1626
          %1632 = dma.vmem_to_hbm [thread:$0]  %s1627, 4096, %s1625, %s1613, 128, 128, 8
        $region64: #{tpu_custom_call.1} parent=39 // pred_fallthru
          _
      $region40: #{tpu_custom_call.1} parent=5 // pred_fallthru
        _
      %p1633 = scmp.le.s32.totalorder 2, %s19
      // Predicated region
      $region65: #{tpu_custom_call.1} parent=5 // pred_check
        %p1634 = pneg %p1633
      $region66: #{tpu_custom_call.1} parent=5 // pred_check_branch
        %1636 = sbr.rel (%p1634) target = $region68
      $region67: #{tpu_custom_call.1} parent=5 // pred_region
        %s1637 = ssub.s32 %s19, 2
        // Predicated region
        $region69: #{tpu_custom_call.1} parent=67 // pred_check
          %p1638 = pneg %p158
        $region70: #{tpu_custom_call.1} parent=67 // pred_check_branch
          %1640 = sbr.rel (%p1638) target = $region72
        $region71: #{tpu_custom_call.1} parent=67 // pred_region
          %s1641 = sand.u32 %s143, 1
          %s1642 = scalar_lea.sflag [#allocation4], %s1641
          %s1643 = sand.u32 %s143, 1
          %s1644 = smul.addr %s1643, 256
          %s1645 = scalar_lea.vmem [#allocation11], %s1644
          %1646 = dma.done %s1642, 4096
        $region72: #{tpu_custom_call.1} parent=67 // pred_fallthru
          _
      $region68: #{tpu_custom_call.1} parent=5 // pred_fallthru
        _
    $region6: #{tpu_custom_call.1} parent=1 // loop_footer
      %s23 = sadd.s32 1, %s19
    $region7: #{tpu_custom_call.1} parent=1 // loop_footer_branch
      %18 = sbr.rel target = $region3
    $region8: #{tpu_custom_call.1} parent=1 // loop_exit
      _
    %1647 = vsyncpa [#allocation3], 1
    %s1648 = scalar_lea.sflag [#allocation3], 1
    %1649 = vsyncpa %s1648, 1
    %1650 = vsyncpa [#allocation6], 1
    %1651 = vsyncpa [#allocation9], 1
    %1652 = vsyncpa [#allocation4], 1
    %s1653 = scalar_lea.sflag [#allocation4], 1
    %1654 = vsyncpa %s1653, 1

</llo_original>
